<compile_context>
chip_gen: v5e
topology: v5e:2x2
jax: 0.10.0
libtpu: 0.0.40
codegen_flags: <defaults>
</compile_context>

<pallas_src>
import jax
import jax.numpy as jnp
from jax.experimental import pallas as pl
from jax.experimental.pallas import tpu as pltpu

# ---- config (mirrors the PyTorch `config` class) ----
EMBED_DIM = 768
OUT_CH = 16
NUM_CLASSES = 2
KSIZES = (3, 4, 5)
PADS = (2, 3, 4)
MAXK = max(KSIZES)

GROUP = len(KSIZES) * OUT_CH   # 48 lanes: one tap of every branch (br1|br2|br3)
NPAD = 256                     # fused conv-weight lanes (>= MAXK*GROUP), MXU aligned
OUT_LANES = 128                # lane-dense logits slab; real classes live in [:NUM_CLASSES]
LPAD = 8                       # leading zero rows per example in the conv-result scratch
TPAD = 8                       # trailing zero rows (absorbs tap over-read, keeps Spe % 8 == 0)
NEG = -1.0e30                  # "invalid position" value folded into the bias constant

# Guard the layout assumptions the tap-sum relies on (flagged in review).
assert all(p <= LPAD for p in PADS)
assert all(p - k + MAXK <= TPAD for p, k in zip(PADS, KSIZES))
assert MAXK * GROUP <= NPAD


def _round_up(a, m):
    return -(-a // m) * m


def _kimcnn_kernel(x_ref, w_ref, mb_ref, fcw_ref, fcb_ref, out_ref, y_ref):
    Bt, Sx, E = x_ref.shape
    _, Spe, NP = y_ref.shape
    Lc = Spe - TPAD                      # conv rows fed to the masked max-pool (= Sx + LPAD)

    # Zero only the per-example pad bands (16 rows/example) -- the zero activation rows
    # of the original padded conv contribute exactly zero, so no activation copy needed.
    y_ref[:, 0:LPAD, :] = jnp.zeros((Bt, LPAD, NP), jnp.float32)
    y_ref[:, LPAD + Sx:Spe, :] = jnp.zeros((Bt, TPAD, NP), jnp.float32)

    # One fused bf16 MXU matmul covering every (branch, tap), written straight into the
    # sublane-aligned interior band of the padded scratch.
    y_ref[:, LPAD:LPAD + Sx, :] = jnp.dot(
        x_ref[...].reshape(Bt * Sx, E), w_ref[...],
        preferred_element_type=jnp.float32).reshape(Bt, Sx, NP)

    # Tap-sum on the VPU/XLU. Tap-major lane layout => same row shift for every branch:
    #   acc[b, m, j*C + c] = sum_k y[b, m + k, k*GROUP + j*C + c]
    # (missing taps of the short branches are zero columns of W_all -> free).
    acc = y_ref[:, 0:Lc, 0:GROUP]
    for k in range(1, MAXK):
        acc = acc + y_ref[:, k:k + Lc, k * GROUP:(k + 1) * GROUP]

    # mb_ref folds conv bias + validity mask (bias[c] on valid conv output rows, -1e30
    # elsewhere), so bias-add + ReLU + masked global max-pool become one add and maxes.
    act = jnp.maximum(acc + mb_ref[...], 0.0)
    pooled = jnp.max(act, axis=1)                       # (Bt, 3*OUT_CH)

    # TODO(synk): dropout is identity here (eval-mode semantics); train-mode stochastic
    # dropout is not implemented.
    out_ref[...] = jnp.dot(pooled, fcw_ref[...],
                           preferred_element_type=jnp.float32) + fcb_ref[...]


def _pack_params(params):
    """Pack per-layer params into the fused slabs the kernel consumes."""
    w1, b1, w2, b2, w3, b3, fcw, fcb = params
    w_all = jnp.zeros((EMBED_DIM, NPAD), jnp.float32)
    for j, w in enumerate((w1, w2, w3)):          # w: (ksz, E, C)
        for k in range(KSIZES[j]):
            lo = k * GROUP + j * OUT_CH
            w_all = w_all.at[:, lo:lo + OUT_CH].set(w[k])
    b_all = jnp.concatenate([b1, b2, b3], axis=1)                                  # (1, 48)
    fcw_pad = jnp.zeros((GROUP, OUT_LANES), jnp.float32).at[:, :NUM_CLASSES].set(fcw)
    fcb_pad = jnp.zeros((1, OUT_LANES), jnp.float32).at[:, :NUM_CLASSES].set(fcb)
    return w_all.astype(jnp.bfloat16), b_all, fcw_pad, fcb_pad


def _mask_bias(b_all, S, Lc):
    """(Lc, GROUP) constant: conv bias on valid conv output rows, -1e30 elsewhere.

    Valid rows use the ORIGINAL sequence length S (not the 16-rounded one), which
    preserves PyTorch max_pool1d-over-full-length semantics.
    """
    m = jnp.arange(Lc, dtype=jnp.int32)[:, None]
    g = jnp.arange(GROUP, dtype=jnp.int32)[None, :] // OUT_CH       # branch id per lane
    p = jnp.asarray(PADS, jnp.int32)[g]
    k = jnp.asarray(KSIZES, jnp.int32)[g]
    start = LPAD - p
    stop = S + LPAD + p - k + 1
    valid = (m >= start) & (m < stop)
    return jnp.where(valid, jnp.broadcast_to(b_all, (Lc, GROUP)), NEG).astype(jnp.float32)


def _vmem_caps():
    try:
        cap = int(pltpu.get_tpu_info().vmem_capacity_bytes)
    except Exception:
        cap = 64 * 1024 * 1024          # conservative fallback (v7x-sized, safe everywhere)
    return cap // 2, (cap * 3) // 4     # (tile-sizing budget, scoped vmem limit)


def _choose_bt(B, Sx, Spe, budget):
    """Batch tile: ~2k flattened matmul rows per step, capped by the VMEM budget."""
    bt = max(8, _round_up(max(1, 2048 // Sx), 8))

    def step_bytes(b):
        x_blk = 2 * b * Sx * EMBED_DIM * 2      # double-buffered bf16 activation block
        y_scr = b * Spe * NPAD * 4              # padded conv-result scratch
        stage = b * Sx * NPAD * 4               # matmul-result / tap-sum staging
        return x_blk + y_scr + stage + (4 << 20)

    while bt > 8 and step_bytes(bt) > budget:
        bt -= 8
    bp8 = _round_up(B, 8)
    bt = min(bt, bp8)
    if B >= 16 and bt >= bp8:
        bt = max(8, _round_up(bp8 // 2, 8))     # >=2 grid steps so both v7x TCs get work
    return bt


def kimcnn_forward(x, params):
    """x: (B, S, EMBED_DIM) float32  ->  logits (B, NUM_CLASSES) float32."""
    B, S, E = x.shape
    assert E == EMBED_DIM and B >= 1 and S >= 1

    w_all, b_all, fcw_pad, fcb_pad = _pack_params(params)

    # Round the sequence up to the bf16 sublane tile (16); extra rows are zeros and the
    # pooling mask is built from the original S, so semantics are unchanged.
    Sx = _round_up(S, 16)
    Spe = LPAD + Sx + TPAD
    Lc = LPAD + Sx
    mask_bias = _mask_bias(b_all, S, Lc)

    budget, vmem_limit = _vmem_caps()
    Bt = _choose_bt(B, Sx, Spe, budget)
    Bp = _round_up(B, Bt)

    xb = x.astype(jnp.bfloat16)
    if Bp != B or Sx != S:
        xb = jnp.pad(xb, ((0, Bp - B), (0, Sx - S), (0, 0)))

    out = pl.pallas_call(
        _kimcnn_kernel,
        out_shape=jax.ShapeDtypeStruct((Bp, OUT_LANES), jnp.float32),
        grid=(Bp // Bt,),
        in_specs=[
            pl.BlockSpec((Bt, Sx, EMBED_DIM), lambda b: (b, 0, 0)),   # activations (bf16)
            pl.BlockSpec((EMBED_DIM, NPAD), lambda b: (0, 0)),        # fused conv weights (bf16)
            pl.BlockSpec((Lc, GROUP), lambda b: (0, 0)),              # fused bias+mask constant
            pl.BlockSpec((GROUP, OUT_LANES), lambda b: (0, 0)),       # fc weight (lane padded)
            pl.BlockSpec((1, OUT_LANES), lambda b: (0, 0)),           # fc bias (lane padded)
        ],
        out_specs=pl.BlockSpec((Bt, OUT_LANES), lambda b: (b, 0)),
        scratch_shapes=[
            pltpu.VMEM((Bt, Spe, NPAD), jnp.float32),   # per-example zero-padded conv result
        ],
        compiler_params=pltpu.CompilerParams(
            dimension_semantics=("parallel",),
            vmem_limit_bytes=int(vmem_limit),
        ),
    )(xb, w_all, mask_bias, fcw_pad, fcb_pad)
    return out[:B, :NUM_CLASSES]


def init_params(key):
    """Deterministic synthetic parameters matching the nn.Module shapes.

    PyTorch shapes: conv{i}.weight (C, 1, k_i, E), conv{i}.bias (C,),
    fc1.weight (num_classes, 3*C), fc1.bias (num_classes,).
    Conv weights are stored pre-transposed as (k_i, E, C); fc weight as (3C, NC).
    """
    keys = jax.random.split(key, 8)

    def conv_w(k, ksz):
        w_pt = jax.random.normal(k, (OUT_CH, 1, ksz, EMBED_DIM), jnp.float32) * 0.02
        return jnp.transpose(w_pt[:, 0], (1, 2, 0))  # (ksz, E, C)

    w1 = conv_w(keys[0], KSIZES[0])
    b1 = jax.random.normal(keys[1], (1, OUT_CH), jnp.float32) * 0.02
    w2 = conv_w(keys[2], KSIZES[1])
    b2 = jax.random.normal(keys[3], (1, OUT_CH), jnp.float32) * 0.02
    w3 = conv_w(keys[4], KSIZES[2])
    b3 = jax.random.normal(keys[5], (1, OUT_CH), jnp.float32) * 0.02
    fcw_pt = jax.random.normal(keys[6], (NUM_CLASSES, 3 * OUT_CH), jnp.float32) * 0.02
    fcw = fcw_pt.T  # (3C, NC)
    fcb = jax.random.normal(keys[7], (1, NUM_CLASSES), jnp.float32) * 0.02
    return (w1, b1, w2, b2, w3, b3, fcw, fcb)


def reference_forward(x, params, conv_dtype=jnp.float32):
    """Pure-JAX reference of the PyTorch forward (eval mode).

    conv_dtype=bfloat16 rounds x / conv weights exactly like the kernel's bf16 MXU
    matmul, so the comparison tolerance only has to cover summation-order noise.
    """
    w1, b1, w2, b2, w3, b3, fcw, fcb = params
    xc = x.astype(conv_dtype).astype(jnp.float32)
    feats = []
    for w, b, ksz, pad in ((w1, b1, KSIZES[0], PADS[0]),
                           (w2, b2, KSIZES[1], PADS[1]),
                           (w3, b3, KSIZES[2], PADS[2])):
        wc = w.astype(conv_dtype).astype(jnp.float32)
        xp = jnp.pad(xc, ((0, 0), (pad, pad), (0, 0)))
        lout = x.shape[1] + 2 * pad - ksz + 1
        cols = jnp.stack([xp[:, k:k + lout, :] for k in range(ksz)], axis=2)  # (B, lout, k, E)
        conv = jnp.einsum('blke,kec->blc', cols, wc,
                          precision=jax.lax.Precision.HIGHEST) + b[None]
        conv = jnp.maximum(conv, 0.0)
        feats.append(jnp.max(conv, axis=1))  # (B, C)
    feat = jnp.concatenate(feats, axis=-1)   # (B, 3C)
    return jnp.dot(feat, fcw, precision=jax.lax.Precision.HIGHEST) + fcb


if __name__ == "__main__":
    key = jax.random.PRNGKey(0)
    pkey, xkey, xkey2 = jax.random.split(key, 3)

    params = init_params(pkey)

    # Case 1: small batch, short sequence of BERT embeddings.
    B, S = 2, 8
    x = jax.random.normal(xkey, (B, S, EMBED_DIM), jnp.float32)
    logits = jax.block_until_ready(kimcnn_forward(x, params))
    ref = reference_forward(x, params, conv_dtype=jnp.bfloat16)
    assert logits.shape == (B, NUM_CLASSES), logits.shape
    assert jnp.allclose(logits, ref, atol=5e-3, rtol=5e-3), (logits, ref)

    # Case 2: ragged shapes -> exercises sequence/batch padding and a multi-step grid.
    B2, S2 = 20, 21
    x2 = jax.random.normal(xkey2, (B2, S2, EMBED_DIM), jnp.float32)
    logits2 = jax.block_until_ready(kimcnn_forward(x2, params))
    ref2 = reference_forward(x2, params, conv_dtype=jnp.bfloat16)
    assert logits2.shape == (B2, NUM_CLASSES), logits2.shape
    assert jnp.allclose(logits2, ref2, atol=5e-3, rtol=5e-3), (logits2, ref2)

    print("KERNEL_OK")
</pallas_src>

<mosaic_0001>
module attributes {stable_mosaic.version = 11 : i64} {
  func.func @_kimcnn_kernel(%arg0: i32, %arg1: memref<8x16x768xbf16, #tpu.memory_space<vmem>>, %arg2: memref<768x256xbf16, #tpu.memory_space<vmem>>, %arg3: memref<24x48xf32, #tpu.memory_space<vmem>>, %arg4: memref<48x128xf32, #tpu.memory_space<vmem>>, %arg5: memref<1x128xf32, #tpu.memory_space<vmem>>, %arg6: memref<8x128xf32, #tpu.memory_space<vmem>>, %arg7: memref<8x32x256xf32, #tpu.memory_space<vmem>>) attributes {dimension_semantics = [#tpu.dimension_semantics<parallel>], iteration_bounds = array<i64: 1>, scalar_prefetch = 0 : i64, scratch_operands = 1 : i64, tpu.core_type = #tpu.core_type<tc>, window_params = [{transform_indices = @transform_0, window_bounds = array<i64: 8, 16, 768>}, {pipeline_mode = #tpu.pipeline_mode<synchronous>, transform_indices = @transform_1, window_bounds = array<i64: 768, 256>}, {pipeline_mode = #tpu.pipeline_mode<synchronous>, transform_indices = @transform_2, window_bounds = array<i64: 24, 48>}, {pipeline_mode = #tpu.pipeline_mode<synchronous>, transform_indices = @transform_3, window_bounds = array<i64: 48, 128>}, {pipeline_mode = #tpu.pipeline_mode<synchronous>, transform_indices = @transform_4, window_bounds = array<i64: 1, 128>}, {transform_indices = @transform_5, window_bounds = array<i64: 8, 128>}]} {
    %cst = arith.constant 0.000000e+00 : f32
    %0 = vector.broadcast %cst : f32 to vector<8x8x256xf32>
    %c0 = arith.constant 0 : index
    %c0_0 = arith.constant 0 : index
    %c0_1 = arith.constant 0 : index
    %1 = vector.load %arg7[%c0, %c0_0, %c0_1] : memref<8x32x256xf32, #tpu.memory_space<vmem>>, vector<8x8x256xf32>
    tpu.vector_store %arg7[%c0, %c0_0, %c0_1], %0 {strides = array<i32>} : memref<8x32x256xf32, #tpu.memory_space<vmem>>, vector<8x8x256xf32>,
    %cst_2 = arith.constant 0.000000e+00 : f32
    %2 = vector.broadcast %cst_2 : f32 to vector<8x8x256xf32>
    %c0_3 = arith.constant 0 : index
    %c24 = arith.constant 24 : index
    %c0_4 = arith.constant 0 : index
    %3 = vector.load %arg7[%c0_3, %c24, %c0_4] : memref<8x32x256xf32, #tpu.memory_space<vmem>>, vector<8x8x256xf32>
    tpu.vector_store %arg7[%c0_3, %c24, %c0_4], %2 {strides = array<i32>} : memref<8x32x256xf32, #tpu.memory_space<vmem>>, vector<8x8x256xf32>,
    %c0_5 = arith.constant 0 : index
    %c0_6 = arith.constant 0 : index
    %c0_7 = arith.constant 0 : index
    %4 = vector.load %arg1[%c0_5, %c0_6, %c0_7] : memref<8x16x768xbf16, #tpu.memory_space<vmem>>, vector<8x16x768xbf16>
    %5 = vector.shape_cast %4 : vector<8x16x768xbf16> to vector<128x768xbf16>
    %c0_8 = arith.constant 0 : index
    %c0_9 = arith.constant 0 : index
    %6 = vector.load %arg2[%c0_8, %c0_9] : memref<768x256xbf16, #tpu.memory_space<vmem>>, vector<768x256xbf16>
    %cst_10 = arith.constant dense<0.000000e+00> : vector<128x256xf32>
    %7 = tpu.matmul %5, %6, %cst_10 {dimension_numbers = #tpu.dot_dimension_numbers<[1], [0], [0], [1], [0, 0, 1, 1], [], []>} : vector<128x768xbf16>, vector<768x256xbf16>, vector<128x256xf32> -> vector<128x256xf32>
    %8 = vector.shape_cast %7 : vector<128x256xf32> to vector<8x16x256xf32>
    %c0_11 = arith.constant 0 : index
    %c8 = arith.constant 8 : index
    %c0_12 = arith.constant 0 : index
    %9 = vector.load %arg7[%c0_11, %c8, %c0_12] : memref<8x32x256xf32, #tpu.memory_space<vmem>>, vector<8x16x256xf32>
    tpu.vector_store %arg7[%c0_11, %c8, %c0_12], %8 {strides = array<i32>} : memref<8x32x256xf32, #tpu.memory_space<vmem>>, vector<8x16x256xf32>,
    %c0_13 = arith.constant 0 : index
    %c0_14 = arith.constant 0 : index
    %c0_15 = arith.constant 0 : index
    %10 = vector.load %arg7[%c0_13, %c0_14, %c0_15] : memref<8x32x256xf32, #tpu.memory_space<vmem>>, vector<8x24x48xf32>
    %c0_16 = arith.constant 0 : index
    %c1 = arith.constant 1 : index
    %c48 = arith.constant 48 : index
    %11 = vector.load %arg7[%c0_16, %c1, %c48] : memref<8x32x256xf32, #tpu.memory_space<vmem>>, vector<8x24x48xf32>
    %12 = arith.addf %10, %11 : vector<8x24x48xf32>
    %c0_17 = arith.constant 0 : index
    %c2 = arith.constant 2 : index
    %c96 = arith.constant 96 : index
    %13 = vector.load %arg7[%c0_17, %c2, %c96] : memref<8x32x256xf32, #tpu.memory_space<vmem>>, vector<8x24x48xf32>
    %14 = arith.addf %12, %13 : vector<8x24x48xf32>
    %c0_18 = arith.constant 0 : index
    %c3 = arith.constant 3 : index
    %c144 = arith.constant 144 : index
    %15 = vector.load %arg7[%c0_18, %c3, %c144] : memref<8x32x256xf32, #tpu.memory_space<vmem>>, vector<8x24x48xf32>
    %16 = arith.addf %14, %15 : vector<8x24x48xf32>
    %c0_19 = arith.constant 0 : index
    %c4 = arith.constant 4 : index
    %c192 = arith.constant 192 : index
    %17 = vector.load %arg7[%c0_19, %c4, %c192] : memref<8x32x256xf32, #tpu.memory_space<vmem>>, vector<8x24x48xf32>
    %18 = arith.addf %16, %17 : vector<8x24x48xf32>
    %c0_20 = arith.constant 0 : index
    %c0_21 = arith.constant 0 : index
    %19 = vector.load %arg3[%c0_20, %c0_21] : memref<24x48xf32, #tpu.memory_space<vmem>>, vector<24x48xf32>
    %20 = vector.shape_cast %19 : vector<24x48xf32> to vector<1x24x48xf32>
    %21 = vector.broadcast %20 : vector<1x24x48xf32> to vector<8x24x48xf32>
    %22 = arith.addf %18, %21 : vector<8x24x48xf32>
    %cst_22 = arith.constant 0.000000e+00 : f32
    %23 = vector.broadcast %cst_22 : f32 to vector<8x24x48xf32>
    %24 = arith.maximumf %22, %23 : vector<8x24x48xf32>
    %cst_23 = arith.constant dense<0xFF800000> : vector<8x48xf32>
    %25 = vector.multi_reduction <maximumf>, %24, %cst_23 [1] : vector<8x24x48xf32> to vector<8x48xf32>
    %c0_24 = arith.constant 0 : index
    %c0_25 = arith.constant 0 : index
    %26 = vector.load %arg4[%c0_24, %c0_25] : memref<48x128xf32, #tpu.memory_space<vmem>>, vector<48x128xf32>
    %cst_26 = arith.constant dense<0.000000e+00> : vector<8x128xf32>
    %27 = tpu.matmul %25, %26, %cst_26 {dimension_numbers = #tpu.dot_dimension_numbers<[1], [0], [0], [1], [0, 0, 1, 1], [], []>} : vector<8x48xf32>, vector<48x128xf32>, vector<8x128xf32> -> vector<8x128xf32>
    %c0_27 = arith.constant 0 : index
    %c0_28 = arith.constant 0 : index
    %28 = vector.load %arg5[%c0_27, %c0_28] : memref<1x128xf32, #tpu.memory_space<vmem>>, vector<1x128xf32>
    %29 = vector.broadcast %28 : vector<1x128xf32> to vector<8x128xf32>
    %30 = arith.addf %27, %29 : vector<8x128xf32>
    %c0_29 = arith.constant 0 : index
    %c0_30 = arith.constant 0 : index
    %31 = vector.load %arg6[%c0_29, %c0_30] : memref<8x128xf32, #tpu.memory_space<vmem>>, vector<8x128xf32>
    tpu.vector_store %arg6[%c0_29, %c0_30], %30 {strides = array<i32>} : memref<8x128xf32, #tpu.memory_space<vmem>>, vector<8x128xf32>,
    return
  }
  func.func @transform_0(%arg0: i32) -> (i32, i32, i32) {
    %c0_i32 = arith.constant 0 : i32
    %c0_i32_0 = arith.constant 0 : i32
    %c0_i32_1 = arith.constant 0 : i32
    return %arg0, %c0_i32, %c0_i32_0 : i32, i32, i32
  }
  func.func @transform_1(%arg0: i32) -> (i32, i32) {
    %c0_i32 = arith.constant 0 : i32
    %c0_i32_0 = arith.constant 0 : i32
    %c0_i32_1 = arith.constant 0 : i32
    return %c0_i32, %c0_i32_0 : i32, i32
  }
  func.func @transform_2(%arg0: i32) -> (i32, i32) {
    %c0_i32 = arith.constant 0 : i32
    %c0_i32_0 = arith.constant 0 : i32
    %c0_i32_1 = arith.constant 0 : i32
    return %c0_i32, %c0_i32_0 : i32, i32
  }
  func.func @transform_3(%arg0: i32) -> (i32, i32) {
    %c0_i32 = arith.constant 0 : i32
    %c0_i32_0 = arith.constant 0 : i32
    %c0_i32_1 = arith.constant 0 : i32
    return %c0_i32, %c0_i32_0 : i32, i32
  }
  func.func @transform_4(%arg0: i32) -> (i32, i32) {
    %c0_i32 = arith.constant 0 : i32
    %c0_i32_0 = arith.constant 0 : i32
    %c0_i32_1 = arith.constant 0 : i32
    return %c0_i32, %c0_i32_0 : i32, i32
  }
  func.func @transform_5(%arg0: i32) -> (i32, i32) {
    %c0_i32 = arith.constant 0 : i32
    %c0_i32_0 = arith.constant 0 : i32
    return %arg0, %c0_i32 : i32, i32
  }
}

</mosaic_0001>

<llo_original>
// kernel: tpu_custom_call.1
$region0: #{tpu_custom_call.1}
  #allocation0 [shape = 'u32[]', space=smem, size = 0x4, offset = 0x4, fixed_abs, tag = 'smem constant byte address 0x4 - core index']
  #allocation1 [shape = 'u32[72,128]{1,0:T(1,128)}', space=vmem, size = 0x9000, scoped, tag = 'internal scratch']
  #allocation2 [shape = 'f32[8,32,256]{2,1,0:T(8,128)}', space=vmem, size = 0x40000, scoped, tag = 'scratch operand']
  %s0 = inlined_call_operand.hbm [shape: bf16[8,16,768], index: 0, kind: input, shape index: {}]
  %s1 = inlined_call_operand.hbm [shape: bf16[768,256], index: 1, kind: input, shape index: {}]
  %s2 = inlined_call_operand.hbm [shape: f32[24,48], index: 2, kind: input, shape index: {}]
  %s3 = inlined_call_operand.hbm [shape: f32[48,128], index: 3, kind: input, shape index: {}]
  %s4 = inlined_call_operand.vmem [shape: f32[1,128], index: 4, kind: input, shape index: {}]
  %s5 = inlined_call_operand.hbm [shape: f32[8,128], index: 5, kind: output, shape index: {}]
  %s6 = sld [smem:[#allocation0]]
  $region46: #{tpu_custom_call.1} parent=0
    _
  %s8 = ssub.s32 1, %s6
  %s9 = scalar_select 0, %s8, %s6
  $region1: #{tpu_custom_call.1} parent=0
    #allocation3 [shape = 'u8[196608]{0}', space=vmem, size = 0x30000, scoped, tag = 'input window, operand 0, single buffered']
    #allocation4 [shape = 's32[1]{0}', space=sflag, size = 0x4, scoped, tag = 'scoped memory for tpu_custom_call.1']
    #allocation5 [shape = 's32[1]{0}', space=sflag, size = 0x4, scoped, tag = 'scoped memory for tpu_custom_call.1']
    #allocation6 [shape = 'u8[393216]{0}', space=vmem, size = 0x60000, scoped, tag = 'input window, operand 1, single buffered']
    #allocation7 [shape = 's32[1]{0}', space=sflag, size = 0x4, scoped, tag = 'scoped memory for tpu_custom_call.1']
    #allocation8 [shape = 'u8[12288]{0}', space=vmem, size = 0x3000, scoped, tag = 'input window, operand 2, single buffered']
    #allocation9 [shape = 'u8[24576]{0}', space=vmem, size = 0x6000, scoped, tag = 'input window, operand 3, single buffered']
    #allocation10 [shape = 's32[1]{0}', space=sflag, size = 0x4, scoped, tag = 'scoped memory for tpu_custom_call.1']
    #allocation11 [shape = 'u8[4096]{0}', space=vmem, size = 0x1000, scoped, tag = 'output window, operand 0, single buffered']
    %10 = vsyncpa [#allocation4], 0
    %11 = vsyncpa [#allocation7], 0
    %12 = vsyncpa [#allocation10], 0
    %13 = vsyncpa [#allocation5], 0
    // Predicated region
    $region2: #{tpu_custom_call.1} parent=1 // pred_check
      _
    $region3: #{tpu_custom_call.1} parent=1 // pred_check_branch
      %15 = sbr.rel (0) target = $region5
    $region4: #{tpu_custom_call.1} parent=1 // pred_region
      %17 = vsyncadd [#allocation4], 0
      %s18 = sshll.u32 %s0, 4
      %s19 = int_to_ptr.hbm [resolvable:$true] %s18
      %s20 = sshll.u32 [#allocation3], 4
      %s21 = int_to_ptr.vmem [resolvable:$true] %s20
      %26 = dma.hbm_to_vmem [thread:$0]  %s19, 6144, %s21, [#allocation4], 384, 384, 24
    $region5: #{tpu_custom_call.1} parent=1 // pred_fallthru
      _
    // Predicated region
    $region6: #{tpu_custom_call.1} parent=1 // pred_check
      _
    $region7: #{tpu_custom_call.1} parent=1 // pred_check_branch
      %28 = sbr.rel (0) target = $region9
    $region8: #{tpu_custom_call.1} parent=1 // pred_region
      %30 = vsyncadd [#allocation7], 0
      %s31 = sshll.u32 %s1, 4
      %s32 = int_to_ptr.hbm [resolvable:$true] %s31
      %s33 = sshll.u32 [#allocation6], 4
      %s34 = int_to_ptr.vmem [resolvable:$true] %s33
      %39 = dma.hbm_to_vmem [thread:$0]  %s32, 12288, %s34, [#allocation7], 128, 128, 8
    $region9: #{tpu_custom_call.1} parent=1 // pred_fallthru
      _
    // Predicated region
    $region10: #{tpu_custom_call.1} parent=1 // pred_check
      _
    $region11: #{tpu_custom_call.1} parent=1 // pred_check_branch
      %41 = sbr.rel (0) target = $region13
    $region12: #{tpu_custom_call.1} parent=1 // pred_region
      %43 = vsyncadd [#allocation7], 0
      %s44 = sshll.u32 %s2, 4
      %s45 = int_to_ptr.hbm [resolvable:$true] %s44
      %s46 = sshll.u32 [#allocation8], 4
      %s47 = int_to_ptr.vmem [resolvable:$true] %s46
      %52 = dma.hbm_to_vmem [thread:$0]  %s45, 384, %s47, [#allocation7], 128, 128, 8
    $region13: #{tpu_custom_call.1} parent=1 // pred_fallthru
      _
    // Predicated region
    $region14: #{tpu_custom_call.1} parent=1 // pred_check
      _
    $region15: #{tpu_custom_call.1} parent=1 // pred_check_branch
      %54 = sbr.rel (0) target = $region17
    $region16: #{tpu_custom_call.1} parent=1 // pred_region
      %56 = vsyncadd [#allocation10], 0
      %s57 = sshll.u32 %s3, 4
      %s58 = int_to_ptr.hbm [resolvable:$true] %s57
      %s59 = sshll.u32 [#allocation9], 4
      %s60 = int_to_ptr.vmem [resolvable:$true] %s59
      %65 = dma.hbm_to_vmem [thread:$0]  %s58, 768, %s60, [#allocation10], 128, 128, 8
    $region17: #{tpu_custom_call.1} parent=1 // pred_fallthru
      _
    // Predicated region
    $region18: #{tpu_custom_call.1} parent=1 // pred_check
      _
    $region19: #{tpu_custom_call.1} parent=1 // pred_check_branch
      %67 = sbr.rel (0) target = $region21
    $region20: #{tpu_custom_call.1} parent=1 // pred_region
      _
    $region21: #{tpu_custom_call.1} parent=1 // pred_fallthru
      _
    // Predicated region
    $region22: #{tpu_custom_call.1} parent=1 // pred_check
      _
    $region23: #{tpu_custom_call.1} parent=1 // pred_check_branch
      %69 = sbr.rel (0) target = $region25
    $region24: #{tpu_custom_call.1} parent=1 // pred_region
      %71 = dma.done [#allocation4], 6144
    $region25: #{tpu_custom_call.1} parent=1 // pred_fallthru
      _
    // Predicated region
    $region26: #{tpu_custom_call.1} parent=1 // pred_check
      _
    $region27: #{tpu_custom_call.1} parent=1 // pred_check_branch
      %73 = sbr.rel (0) target = $region29
    $region28: #{tpu_custom_call.1} parent=1 // pred_region
      %75 = dma.done [#allocation7], 12288
    $region29: #{tpu_custom_call.1} parent=1 // pred_fallthru
      _
    // Predicated region
    $region30: #{tpu_custom_call.1} parent=1 // pred_check
      _
    $region31: #{tpu_custom_call.1} parent=1 // pred_check_branch
      %77 = sbr.rel (0) target = $region33
    $region32: #{tpu_custom_call.1} parent=1 // pred_region
      %79 = dma.done [#allocation7], 384
    $region33: #{tpu_custom_call.1} parent=1 // pred_fallthru
      _
    // Predicated region
    $region34: #{tpu_custom_call.1} parent=1 // pred_check
      _
    $region35: #{tpu_custom_call.1} parent=1 // pred_check_branch
      %81 = sbr.rel (0) target = $region37
    $region36: #{tpu_custom_call.1} parent=1 // pred_region
      %83 = dma.done [#allocation10], 768
    $region37: #{tpu_custom_call.1} parent=1 // pred_fallthru
      _
    %84 = vst [vmem:[#allocation2] sm:$0xff] 0.0
    %85 = vst [vmem:[#allocation2 + $0x8] sm:$0xff] 0.0
    %86 = vst [vmem:[#allocation2 + $0x40] sm:$0xff] 0.0
    %87 = vst [vmem:[#allocation2 + $0x48] sm:$0xff] 0.0
    %88 = vst [vmem:[#allocation2 + $0x80] sm:$0xff] 0.0
    %89 = vst [vmem:[#allocation2 + $0x88] sm:$0xff] 0.0
    %90 = vst [vmem:[#allocation2 + $0xc0] sm:$0xff] 0.0
    %91 = vst [vmem:[#allocation2 + $0xc8] sm:$0xff] 0.0
    %92 = vst [vmem:[#allocation2 + $0x100] sm:$0xff] 0.0
    %93 = vst [vmem:[#allocation2 + $0x108] sm:$0xff] 0.0
    %94 = vst [vmem:[#allocation2 + $0x140] sm:$0xff] 0.0
    %95 = vst [vmem:[#allocation2 + $0x148] sm:$0xff] 0.0
    %96 = vst [vmem:[#allocation2 + $0x180] sm:$0xff] 0.0
    %97 = vst [vmem:[#allocation2 + $0x188] sm:$0xff] 0.0
    %98 = vst [vmem:[#allocation2 + $0x1c0] sm:$0xff] 0.0
    %99 = vst [vmem:[#allocation2 + $0x1c8] sm:$0xff] 0.0
    %100 = vst [vmem:[#allocation2 + $0x30] sm:$0xff] 0.0
    %101 = vst [vmem:[#allocation2 + $0x38] sm:$0xff] 0.0
    %102 = vst [vmem:[#allocation2 + $0x70] sm:$0xff] 0.0
    %103 = vst [vmem:[#allocation2 + $0x78] sm:$0xff] 0.0
    %104 = vst [vmem:[#allocation2 + $0xb0] sm:$0xff] 0.0
    %105 = vst [vmem:[#allocation2 + $0xb8] sm:$0xff] 0.0
    %106 = vst [vmem:[#allocation2 + $0xf0] sm:$0xff] 0.0
    %107 = vst [vmem:[#allocation2 + $0xf8] sm:$0xff] 0.0
    %108 = vst [vmem:[#allocation2 + $0x130] sm:$0xff] 0.0
    %109 = vst [vmem:[#allocation2 + $0x138] sm:$0xff] 0.0
    %110 = vst [vmem:[#allocation2 + $0x170] sm:$0xff] 0.0
    %111 = vst [vmem:[#allocation2 + $0x178] sm:$0xff] 0.0
    %112 = vst [vmem:[#allocation2 + $0x1b0] sm:$0xff] 0.0
    %113 = vst [vmem:[#allocation2 + $0x1b8] sm:$0xff] 0.0
    %114 = vst [vmem:[#allocation2 + $0x1f0] sm:$0xff] 0.0
    %115 = vst [vmem:[#allocation2 + $0x1f8] sm:$0xff] 0.0
    %v116 = vld [vmem:[#allocation3] sm:$0xff]
    %v117 = vld [vmem:[#allocation3 + $0x8] sm:$0xff]
    %v118 = vld [vmem:[#allocation3 + $0x10] sm:$0xff]
    %v119 = vld [vmem:[#allocation3 + $0x18] sm:$0xff]
    %v120 = vld [vmem:[#allocation3 + $0x20] sm:$0xff]
    %v121 = vld [vmem:[#allocation3 + $0x28] sm:$0xff]
    %v122 = vld [vmem:[#allocation3 + $0x30] sm:$0xff]
    %v123 = vld [vmem:[#allocation3 + $0x38] sm:$0xff]
    %v124 = vld [vmem:[#allocation3 + $0x40] sm:$0xff]
    %v125 = vld [vmem:[#allocation3 + $0x48] sm:$0xff]
    %v126 = vld [vmem:[#allocation3 + $0x50] sm:$0xff]
    %v127 = vld [vmem:[#allocation3 + $0x58] sm:$0xff]
    %v128 = vld [vmem:[#allocation3 + $0x60] sm:$0xff]
    %v129 = vld [vmem:[#allocation3 + $0x68] sm:$0xff]
    %v130 = vld [vmem:[#allocation3 + $0x70] sm:$0xff]
    %v131 = vld [vmem:[#allocation3 + $0x78] sm:$0xff]
    %v132 = vld [vmem:[#allocation3 + $0x80] sm:$0xff]
    %v133 = vld [vmem:[#allocation3 + $0x88] sm:$0xff]
    %v134 = vld [vmem:[#allocation3 + $0x90] sm:$0xff]
    %v135 = vld [vmem:[#allocation3 + $0x98] sm:$0xff]
    %v136 = vld [vmem:[#allocation3 + $0xa0] sm:$0xff]
    %v137 = vld [vmem:[#allocation3 + $0xa8] sm:$0xff]
    %v138 = vld [vmem:[#allocation3 + $0xb0] sm:$0xff]
    %v139 = vld [vmem:[#allocation3 + $0xb8] sm:$0xff]
    %v140 = vld [vmem:[#allocation3 + $0xc0] sm:$0xff]
    %v141 = vld [vmem:[#allocation3 + $0xc8] sm:$0xff]
    %v142 = vld [vmem:[#allocation3 + $0xd0] sm:$0xff]
    %v143 = vld [vmem:[#allocation3 + $0xd8] sm:$0xff]
    %v144 = vld [vmem:[#allocation3 + $0xe0] sm:$0xff]
    %v145 = vld [vmem:[#allocation3 + $0xe8] sm:$0xff]
    %v146 = vld [vmem:[#allocation3 + $0xf0] sm:$0xff]
    %v147 = vld [vmem:[#allocation3 + $0xf8] sm:$0xff]
    %v148 = vld [vmem:[#allocation3 + $0x100] sm:$0xff]
    %v149 = vld [vmem:[#allocation3 + $0x108] sm:$0xff]
    %v150 = vld [vmem:[#allocation3 + $0x110] sm:$0xff]
    %v151 = vld [vmem:[#allocation3 + $0x118] sm:$0xff]
    %v152 = vld [vmem:[#allocation3 + $0x120] sm:$0xff]
    %v153 = vld [vmem:[#allocation3 + $0x128] sm:$0xff]
    %v154 = vld [vmem:[#allocation3 + $0x130] sm:$0xff]
    %v155 = vld [vmem:[#allocation3 + $0x138] sm:$0xff]
    %v156 = vld [vmem:[#allocation3 + $0x140] sm:$0xff]
    %v157 = vld [vmem:[#allocation3 + $0x148] sm:$0xff]
    %v158 = vld [vmem:[#allocation3 + $0x150] sm:$0xff]
    %v159 = vld [vmem:[#allocation3 + $0x158] sm:$0xff]
    %v160 = vld [vmem:[#allocation3 + $0x160] sm:$0xff]
    %v161 = vld [vmem:[#allocation3 + $0x168] sm:$0xff]
    %v162 = vld [vmem:[#allocation3 + $0x170] sm:$0xff]
    %v163 = vld [vmem:[#allocation3 + $0x178] sm:$0xff]
    %v164 = vld [vmem:[#allocation6] sm:$0xff]
    %v165 = vld [vmem:[#allocation6 + $0x8] sm:$0xff]
    %v166 = vld [vmem:[#allocation6 + $0x10] sm:$0xff]
    %v167 = vld [vmem:[#allocation6 + $0x18] sm:$0xff]
    %v168 = vld [vmem:[#allocation6 + $0x20] sm:$0xff]
    %v169 = vld [vmem:[#allocation6 + $0x28] sm:$0xff]
    %v170 = vld [vmem:[#allocation6 + $0x30] sm:$0xff]
    %v171 = vld [vmem:[#allocation6 + $0x38] sm:$0xff]
    %v172 = vld [vmem:[#allocation6 + $0x40] sm:$0xff]
    %v173 = vld [vmem:[#allocation6 + $0x48] sm:$0xff]
    %v174 = vld [vmem:[#allocation6 + $0x50] sm:$0xff]
    %v175 = vld [vmem:[#allocation6 + $0x58] sm:$0xff]
    %v176 = vld [vmem:[#allocation6 + $0x60] sm:$0xff]
    %v177 = vld [vmem:[#allocation6 + $0x68] sm:$0xff]
    %v178 = vld [vmem:[#allocation6 + $0x70] sm:$0xff]
    %v179 = vld [vmem:[#allocation6 + $0x78] sm:$0xff]
    %v180 = vld [vmem:[#allocation6 + $0x80] sm:$0xff]
    %v181 = vld [vmem:[#allocation6 + $0x88] sm:$0xff]
    %v182 = vld [vmem:[#allocation6 + $0x90] sm:$0xff]
    %v183 = vld [vmem:[#allocation6 + $0x98] sm:$0xff]
    %v184 = vld [vmem:[#allocation6 + $0xa0] sm:$0xff]
    %v185 = vld [vmem:[#allocation6 + $0xa8] sm:$0xff]
    %v186 = vld [vmem:[#allocation6 + $0xb0] sm:$0xff]
    %v187 = vld [vmem:[#allocation6 + $0xb8] sm:$0xff]
    %v188 = vld [vmem:[#allocation6 + $0xc0] sm:$0xff]
    %v189 = vld [vmem:[#allocation6 + $0xc8] sm:$0xff]
    %v190 = vld [vmem:[#allocation6 + $0xd0] sm:$0xff]
    %v191 = vld [vmem:[#allocation6 + $0xd8] sm:$0xff]
    %v192 = vld [vmem:[#allocation6 + $0xe0] sm:$0xff]
    %v193 = vld [vmem:[#allocation6 + $0xe8] sm:$0xff]
    %v194 = vld [vmem:[#allocation6 + $0xf0] sm:$0xff]
    %v195 = vld [vmem:[#allocation6 + $0xf8] sm:$0xff]
    %v196 = vld [vmem:[#allocation6 + $0x100] sm:$0xff]
    %v197 = vld [vmem:[#allocation6 + $0x108] sm:$0xff]
    %v198 = vld [vmem:[#allocation6 + $0x110] sm:$0xff]
    %v199 = vld [vmem:[#allocation6 + $0x118] sm:$0xff]
    %v200 = vld [vmem:[#allocation6 + $0x120] sm:$0xff]
    %v201 = vld [vmem:[#allocation6 + $0x128] sm:$0xff]
    %v202 = vld [vmem:[#allocation6 + $0x130] sm:$0xff]
    %v203 = vld [vmem:[#allocation6 + $0x138] sm:$0xff]
    %v204 = vld [vmem:[#allocation6 + $0x140] sm:$0xff]
    %v205 = vld [vmem:[#allocation6 + $0x148] sm:$0xff]
    %v206 = vld [vmem:[#allocation6 + $0x150] sm:$0xff]
    %v207 = vld [vmem:[#allocation6 + $0x158] sm:$0xff]
    %v208 = vld [vmem:[#allocation6 + $0x160] sm:$0xff]
    %v209 = vld [vmem:[#allocation6 + $0x168] sm:$0xff]
    %v210 = vld [vmem:[#allocation6 + $0x170] sm:$0xff]
    %v211 = vld [vmem:[#allocation6 + $0x178] sm:$0xff]
    %v212 = vld [vmem:[#allocation6 + $0x180] sm:$0xff]
    %v213 = vld [vmem:[#allocation6 + $0x188] sm:$0xff]
    %v214 = vld [vmem:[#allocation6 + $0x190] sm:$0xff]
    %v215 = vld [vmem:[#allocation6 + $0x198] sm:$0xff]
    %v216 = vld [vmem:[#allocation6 + $0x1a0] sm:$0xff]
    %v217 = vld [vmem:[#allocation6 + $0x1a8] sm:$0xff]
    %v218 = vld [vmem:[#allocation6 + $0x1b0] sm:$0xff]
    %v219 = vld [vmem:[#allocation6 + $0x1b8] sm:$0xff]
    %v220 = vld [vmem:[#allocation6 + $0x1c0] sm:$0xff]
    %v221 = vld [vmem:[#allocation6 + $0x1c8] sm:$0xff]
    %v222 = vld [vmem:[#allocation6 + $0x1d0] sm:$0xff]
    %v223 = vld [vmem:[#allocation6 + $0x1d8] sm:$0xff]
    %v224 = vld [vmem:[#allocation6 + $0x1e0] sm:$0xff]
    %v225 = vld [vmem:[#allocation6 + $0x1e8] sm:$0xff]
    %v226 = vld [vmem:[#allocation6 + $0x1f0] sm:$0xff]
    %v227 = vld [vmem:[#allocation6 + $0x1f8] sm:$0xff]
    %v228 = vld [vmem:[#allocation6 + $0x200] sm:$0xff]
    %v229 = vld [vmem:[#allocation6 + $0x208] sm:$0xff]
    %v230 = vld [vmem:[#allocation6 + $0x210] sm:$0xff]
    %v231 = vld [vmem:[#allocation6 + $0x218] sm:$0xff]
    %v232 = vld [vmem:[#allocation6 + $0x220] sm:$0xff]
    %v233 = vld [vmem:[#allocation6 + $0x228] sm:$0xff]
    %v234 = vld [vmem:[#allocation6 + $0x230] sm:$0xff]
    %v235 = vld [vmem:[#allocation6 + $0x238] sm:$0xff]
    %v236 = vld [vmem:[#allocation6 + $0x240] sm:$0xff]
    %v237 = vld [vmem:[#allocation6 + $0x248] sm:$0xff]
    %v238 = vld [vmem:[#allocation6 + $0x250] sm:$0xff]
    %v239 = vld [vmem:[#allocation6 + $0x258] sm:$0xff]
    %v240 = vld [vmem:[#allocation6 + $0x260] sm:$0xff]
    %v241 = vld [vmem:[#allocation6 + $0x268] sm:$0xff]
    %v242 = vld [vmem:[#allocation6 + $0x270] sm:$0xff]
    %v243 = vld [vmem:[#allocation6 + $0x278] sm:$0xff]
    %v244 = vld [vmem:[#allocation6 + $0x280] sm:$0xff]
    %v245 = vld [vmem:[#allocation6 + $0x288] sm:$0xff]
    %v246 = vld [vmem:[#allocation6 + $0x290] sm:$0xff]
    %v247 = vld [vmem:[#allocation6 + $0x298] sm:$0xff]
    %v248 = vld [vmem:[#allocation6 + $0x2a0] sm:$0xff]
    %v249 = vld [vmem:[#allocation6 + $0x2a8] sm:$0xff]
    %v250 = vld [vmem:[#allocation6 + $0x2b0] sm:$0xff]
    %v251 = vld [vmem:[#allocation6 + $0x2b8] sm:$0xff]
    %v252 = vld [vmem:[#allocation6 + $0x2c0] sm:$0xff]
    %v253 = vld [vmem:[#allocation6 + $0x2c8] sm:$0xff]
    %v254 = vld [vmem:[#allocation6 + $0x2d0] sm:$0xff]
    %v255 = vld [vmem:[#allocation6 + $0x2d8] sm:$0xff]
    %v256 = vld [vmem:[#allocation6 + $0x2e0] sm:$0xff]
    %v257 = vld [vmem:[#allocation6 + $0x2e8] sm:$0xff]
    %v258 = vld [vmem:[#allocation6 + $0x2f0] sm:$0xff]
    %v259 = vld [vmem:[#allocation6 + $0x2f8] sm:$0xff]
    %v308 = vunpack.c.l.b16 %v116
    %v309 = vunpack.c.h.b16 %v116
    %v310 = vunpack.c.l.b16 %v117
    %v311 = vunpack.c.h.b16 %v117
    %v312 = vunpack.c.l.b16 %v118
    %v313 = vunpack.c.h.b16 %v118
    %v314 = vunpack.c.l.b16 %v119
    %v315 = vunpack.c.h.b16 %v119
    %v316 = vunpack.c.l.b16 %v120
    %v317 = vunpack.c.h.b16 %v120
    %v318 = vunpack.c.l.b16 %v121
    %v319 = vunpack.c.h.b16 %v121
    %v320 = vunpack.c.l.b16 %v122
    %v321 = vunpack.c.h.b16 %v122
    %v322 = vunpack.c.l.b16 %v123
    %v323 = vunpack.c.h.b16 %v123
    %v324 = vunpack.c.l.b16 %v124
    %v325 = vunpack.c.h.b16 %v124
    %v326 = vunpack.c.l.b16 %v125
    %v327 = vunpack.c.h.b16 %v125
    %v328 = vunpack.c.l.b16 %v126
    %v329 = vunpack.c.h.b16 %v126
    %v330 = vunpack.c.l.b16 %v127
    %v331 = vunpack.c.h.b16 %v127
    %v332 = vunpack.c.l.b16 %v128
    %v333 = vunpack.c.h.b16 %v128
    %v334 = vunpack.c.l.b16 %v129
    %v335 = vunpack.c.h.b16 %v129
    %v336 = vunpack.c.l.b16 %v130
    %v337 = vunpack.c.h.b16 %v130
    %v338 = vunpack.c.l.b16 %v131
    %v339 = vunpack.c.h.b16 %v131
    %v340 = vunpack.c.l.b16 %v132
    %v341 = vunpack.c.h.b16 %v132
    %v342 = vunpack.c.l.b16 %v133
    %v343 = vunpack.c.h.b16 %v133
    %v344 = vunpack.c.l.b16 %v134
    %v345 = vunpack.c.h.b16 %v134
    %v346 = vunpack.c.l.b16 %v135
    %v347 = vunpack.c.h.b16 %v135
    %v348 = vunpack.c.l.b16 %v136
    %v349 = vunpack.c.h.b16 %v136
    %v350 = vunpack.c.l.b16 %v137
    %v351 = vunpack.c.h.b16 %v137
    %v352 = vunpack.c.l.b16 %v138
    %v353 = vunpack.c.h.b16 %v138
    %v354 = vunpack.c.l.b16 %v139
    %v355 = vunpack.c.h.b16 %v139
    %v356 = vunpack.c.l.b16 %v140
    %v357 = vunpack.c.h.b16 %v140
    %v358 = vunpack.c.l.b16 %v141
    %v359 = vunpack.c.h.b16 %v141
    %v360 = vunpack.c.l.b16 %v142
    %v361 = vunpack.c.h.b16 %v142
    %v362 = vunpack.c.l.b16 %v143
    %v363 = vunpack.c.h.b16 %v143
    %v364 = vunpack.c.l.b16 %v144
    %v365 = vunpack.c.h.b16 %v144
    %v366 = vunpack.c.l.b16 %v145
    %v367 = vunpack.c.h.b16 %v145
    %v368 = vunpack.c.l.b16 %v146
    %v369 = vunpack.c.h.b16 %v146
    %v370 = vunpack.c.l.b16 %v147
    %v371 = vunpack.c.h.b16 %v147
    %v372 = vunpack.c.l.b16 %v148
    %v373 = vunpack.c.h.b16 %v148
    %v374 = vunpack.c.l.b16 %v149
    %v375 = vunpack.c.h.b16 %v149
    %v376 = vunpack.c.l.b16 %v150
    %v377 = vunpack.c.h.b16 %v150
    %v378 = vunpack.c.l.b16 %v151
    %v379 = vunpack.c.h.b16 %v151
    %v380 = vunpack.c.l.b16 %v152
    %v381 = vunpack.c.h.b16 %v152
    %v382 = vunpack.c.l.b16 %v153
    %v383 = vunpack.c.h.b16 %v153
    %v384 = vunpack.c.l.b16 %v154
    %v385 = vunpack.c.h.b16 %v154
    %v386 = vunpack.c.l.b16 %v155
    %v387 = vunpack.c.h.b16 %v155
    %v388 = vunpack.c.l.b16 %v156
    %v389 = vunpack.c.h.b16 %v156
    %v390 = vunpack.c.l.b16 %v157
    %v391 = vunpack.c.h.b16 %v157
    %v392 = vunpack.c.l.b16 %v158
    %v393 = vunpack.c.h.b16 %v158
    %v394 = vunpack.c.l.b16 %v159
    %v395 = vunpack.c.h.b16 %v159
    %v396 = vunpack.c.l.b16 %v160
    %v397 = vunpack.c.h.b16 %v160
    %v398 = vunpack.c.l.b16 %v161
    %v399 = vunpack.c.h.b16 %v161
    %v400 = vunpack.c.l.b16 %v162
    %v401 = vunpack.c.h.b16 %v162
    %v402 = vunpack.c.l.b16 %v163
    %v403 = vunpack.c.h.b16 %v163
    %v404 = vpack.c.b16 %v314, %v308
    %v405 = vpack.c.b16 %v315, %v309
    %v406 = vpack.c.b16 %v316, %v310
    %v407 = vpack.c.b16 %v317, %v311
    %v408 = vpack.c.b16 %v318, %v312
    %v409 = vpack.c.b16 %v319, %v313
    %v410 = vpack.c.b16 %v326, %v320
    %v411 = vpack.c.b16 %v327, %v321
    %v412 = vpack.c.b16 %v328, %v322
    %v413 = vpack.c.b16 %v329, %v323
    %v414 = vpack.c.b16 %v330, %v324
    %v415 = vpack.c.b16 %v331, %v325
    %v416 = vpack.c.b16 %v338, %v332
    %v417 = vpack.c.b16 %v339, %v333
    %v418 = vpack.c.b16 %v340, %v334
    %v419 = vpack.c.b16 %v341, %v335
    %v420 = vpack.c.b16 %v342, %v336
    %v421 = vpack.c.b16 %v343, %v337
    %v422 = vpack.c.b16 %v350, %v344
    %v423 = vpack.c.b16 %v351, %v345
    %v424 = vpack.c.b16 %v352, %v346
    %v425 = vpack.c.b16 %v353, %v347
    %v426 = vpack.c.b16 %v354, %v348
    %v427 = vpack.c.b16 %v355, %v349
    %v428 = vpack.c.b16 %v362, %v356
    %v429 = vpack.c.b16 %v363, %v357
    %v430 = vpack.c.b16 %v364, %v358
    %v431 = vpack.c.b16 %v365, %v359
    %v432 = vpack.c.b16 %v366, %v360
    %v433 = vpack.c.b16 %v367, %v361
    %v434 = vpack.c.b16 %v374, %v368
    %v435 = vpack.c.b16 %v375, %v369
    %v436 = vpack.c.b16 %v376, %v370
    %v437 = vpack.c.b16 %v377, %v371
    %v438 = vpack.c.b16 %v378, %v372
    %v439 = vpack.c.b16 %v379, %v373
    %v440 = vpack.c.b16 %v386, %v380
    %v441 = vpack.c.b16 %v387, %v381
    %v442 = vpack.c.b16 %v388, %v382
    %v443 = vpack.c.b16 %v389, %v383
    %v444 = vpack.c.b16 %v390, %v384
    %v445 = vpack.c.b16 %v391, %v385
    %v446 = vpack.c.b16 %v398, %v392
    %v447 = vpack.c.b16 %v399, %v393
    %v448 = vpack.c.b16 %v400, %v394
    %v449 = vpack.c.b16 %v401, %v395
    %v450 = vpack.c.b16 %v402, %v396
    %v451 = vpack.c.b16 %v403, %v397
    %v596 = vunpack.c.l.b16 %v164
    %v597 = vunpack.c.h.b16 %v164
    %v598 = vunpack.c.l.b16 %v165
    %v599 = vunpack.c.h.b16 %v165
    %v600 = vunpack.c.l.b16 %v166
    %v601 = vunpack.c.h.b16 %v166
    %v602 = vunpack.c.l.b16 %v167
    %v603 = vunpack.c.h.b16 %v167
    %v604 = vunpack.c.l.b16 %v168
    %v605 = vunpack.c.h.b16 %v168
    %v606 = vunpack.c.l.b16 %v169
    %v607 = vunpack.c.h.b16 %v169
    %v608 = vunpack.c.l.b16 %v170
    %v609 = vunpack.c.h.b16 %v170
    %v610 = vunpack.c.l.b16 %v171
    %v611 = vunpack.c.h.b16 %v171
    %v612 = vunpack.c.l.b16 %v172
    %v613 = vunpack.c.h.b16 %v172
    %v614 = vunpack.c.l.b16 %v173
    %v615 = vunpack.c.h.b16 %v173
    %v616 = vunpack.c.l.b16 %v174
    %v617 = vunpack.c.h.b16 %v174
    %v618 = vunpack.c.l.b16 %v175
    %v619 = vunpack.c.h.b16 %v175
    %v620 = vunpack.c.l.b16 %v176
    %v621 = vunpack.c.h.b16 %v176
    %v622 = vunpack.c.l.b16 %v177
    %v623 = vunpack.c.h.b16 %v177
    %v624 = vunpack.c.l.b16 %v178
    %v625 = vunpack.c.h.b16 %v178
    %v626 = vunpack.c.l.b16 %v179
    %v627 = vunpack.c.h.b16 %v179
    %v628 = vunpack.c.l.b16 %v180
    %v629 = vunpack.c.h.b16 %v180
    %v630 = vunpack.c.l.b16 %v181
    %v631 = vunpack.c.h.b16 %v181
    %v632 = vunpack.c.l.b16 %v182
    %v633 = vunpack.c.h.b16 %v182
    %v634 = vunpack.c.l.b16 %v183
    %v635 = vunpack.c.h.b16 %v183
    %v636 = vunpack.c.l.b16 %v184
    %v637 = vunpack.c.h.b16 %v184
    %v638 = vunpack.c.l.b16 %v185
    %v639 = vunpack.c.h.b16 %v185
    %v640 = vunpack.c.l.b16 %v186
    %v641 = vunpack.c.h.b16 %v186
    %v642 = vunpack.c.l.b16 %v187
    %v643 = vunpack.c.h.b16 %v187
    %v644 = vunpack.c.l.b16 %v188
    %v645 = vunpack.c.h.b16 %v188
    %v646 = vunpack.c.l.b16 %v189
    %v647 = vunpack.c.h.b16 %v189
    %v648 = vunpack.c.l.b16 %v190
    %v649 = vunpack.c.h.b16 %v190
    %v650 = vunpack.c.l.b16 %v191
    %v651 = vunpack.c.h.b16 %v191
    %v652 = vunpack.c.l.b16 %v192
    %v653 = vunpack.c.h.b16 %v192
    %v654 = vunpack.c.l.b16 %v193
    %v655 = vunpack.c.h.b16 %v193
    %v656 = vunpack.c.l.b16 %v194
    %v657 = vunpack.c.h.b16 %v194
    %v658 = vunpack.c.l.b16 %v195
    %v659 = vunpack.c.h.b16 %v195
    %v660 = vunpack.c.l.b16 %v196
    %v661 = vunpack.c.h.b16 %v196
    %v662 = vunpack.c.l.b16 %v197
    %v663 = vunpack.c.h.b16 %v197
    %v664 = vunpack.c.l.b16 %v198
    %v665 = vunpack.c.h.b16 %v198
    %v666 = vunpack.c.l.b16 %v199
    %v667 = vunpack.c.h.b16 %v199
    %v668 = vunpack.c.l.b16 %v200
    %v669 = vunpack.c.h.b16 %v200
    %v670 = vunpack.c.l.b16 %v201
    %v671 = vunpack.c.h.b16 %v201
    %v672 = vunpack.c.l.b16 %v202
    %v673 = vunpack.c.h.b16 %v202
    %v674 = vunpack.c.l.b16 %v203
    %v675 = vunpack.c.h.b16 %v203
    %v676 = vunpack.c.l.b16 %v204
    %v677 = vunpack.c.h.b16 %v204
    %v678 = vunpack.c.l.b16 %v205
    %v679 = vunpack.c.h.b16 %v205
    %v680 = vunpack.c.l.b16 %v206
    %v681 = vunpack.c.h.b16 %v206
    %v682 = vunpack.c.l.b16 %v207
    %v683 = vunpack.c.h.b16 %v207
    %v684 = vunpack.c.l.b16 %v208
    %v685 = vunpack.c.h.b16 %v208
    %v686 = vunpack.c.l.b16 %v209
    %v687 = vunpack.c.h.b16 %v209
    %v688 = vunpack.c.l.b16 %v210
    %v689 = vunpack.c.h.b16 %v210
    %v690 = vunpack.c.l.b16 %v211
    %v691 = vunpack.c.h.b16 %v211
    %v692 = vunpack.c.l.b16 %v212
    %v693 = vunpack.c.h.b16 %v212
    %v694 = vunpack.c.l.b16 %v213
    %v695 = vunpack.c.h.b16 %v213
    %v696 = vunpack.c.l.b16 %v214
    %v697 = vunpack.c.h.b16 %v214
    %v698 = vunpack.c.l.b16 %v215
    %v699 = vunpack.c.h.b16 %v215
    %v700 = vunpack.c.l.b16 %v216
    %v701 = vunpack.c.h.b16 %v216
    %v702 = vunpack.c.l.b16 %v217
    %v703 = vunpack.c.h.b16 %v217
    %v704 = vunpack.c.l.b16 %v218
    %v705 = vunpack.c.h.b16 %v218
    %v706 = vunpack.c.l.b16 %v219
    %v707 = vunpack.c.h.b16 %v219
    %v708 = vunpack.c.l.b16 %v220
    %v709 = vunpack.c.h.b16 %v220
    %v710 = vunpack.c.l.b16 %v221
    %v711 = vunpack.c.h.b16 %v221
    %v712 = vunpack.c.l.b16 %v222
    %v713 = vunpack.c.h.b16 %v222
    %v714 = vunpack.c.l.b16 %v223
    %v715 = vunpack.c.h.b16 %v223
    %v716 = vunpack.c.l.b16 %v224
    %v717 = vunpack.c.h.b16 %v224
    %v718 = vunpack.c.l.b16 %v225
    %v719 = vunpack.c.h.b16 %v225
    %v720 = vunpack.c.l.b16 %v226
    %v721 = vunpack.c.h.b16 %v226
    %v722 = vunpack.c.l.b16 %v227
    %v723 = vunpack.c.h.b16 %v227
    %v724 = vunpack.c.l.b16 %v228
    %v725 = vunpack.c.h.b16 %v228
    %v726 = vunpack.c.l.b16 %v229
    %v727 = vunpack.c.h.b16 %v229
    %v728 = vunpack.c.l.b16 %v230
    %v729 = vunpack.c.h.b16 %v230
    %v730 = vunpack.c.l.b16 %v231
    %v731 = vunpack.c.h.b16 %v231
    %v732 = vunpack.c.l.b16 %v232
    %v733 = vunpack.c.h.b16 %v232
    %v734 = vunpack.c.l.b16 %v233
    %v735 = vunpack.c.h.b16 %v233
    %v736 = vunpack.c.l.b16 %v234
    %v737 = vunpack.c.h.b16 %v234
    %v738 = vunpack.c.l.b16 %v235
    %v739 = vunpack.c.h.b16 %v235
    %v740 = vunpack.c.l.b16 %v236
    %v741 = vunpack.c.h.b16 %v236
    %v742 = vunpack.c.l.b16 %v237
    %v743 = vunpack.c.h.b16 %v237
    %v744 = vunpack.c.l.b16 %v238
    %v745 = vunpack.c.h.b16 %v238
    %v746 = vunpack.c.l.b16 %v239
    %v747 = vunpack.c.h.b16 %v239
    %v748 = vunpack.c.l.b16 %v240
    %v749 = vunpack.c.h.b16 %v240
    %v750 = vunpack.c.l.b16 %v241
    %v751 = vunpack.c.h.b16 %v241
    %v752 = vunpack.c.l.b16 %v242
    %v753 = vunpack.c.h.b16 %v242
    %v754 = vunpack.c.l.b16 %v243
    %v755 = vunpack.c.h.b16 %v243
    %v756 = vunpack.c.l.b16 %v244
    %v757 = vunpack.c.h.b16 %v244
    %v758 = vunpack.c.l.b16 %v245
    %v759 = vunpack.c.h.b16 %v245
    %v760 = vunpack.c.l.b16 %v246
    %v761 = vunpack.c.h.b16 %v246
    %v762 = vunpack.c.l.b16 %v247
    %v763 = vunpack.c.h.b16 %v247
    %v764 = vunpack.c.l.b16 %v248
    %v765 = vunpack.c.h.b16 %v248
    %v766 = vunpack.c.l.b16 %v249
    %v767 = vunpack.c.h.b16 %v249
    %v768 = vunpack.c.l.b16 %v250
    %v769 = vunpack.c.h.b16 %v250
    %v770 = vunpack.c.l.b16 %v251
    %v771 = vunpack.c.h.b16 %v251
    %v772 = vunpack.c.l.b16 %v252
    %v773 = vunpack.c.h.b16 %v252
    %v774 = vunpack.c.l.b16 %v253
    %v775 = vunpack.c.h.b16 %v253
    %v776 = vunpack.c.l.b16 %v254
    %v777 = vunpack.c.h.b16 %v254
    %v778 = vunpack.c.l.b16 %v255
    %v779 = vunpack.c.h.b16 %v255
    %v780 = vunpack.c.l.b16 %v256
    %v781 = vunpack.c.h.b16 %v256
    %v782 = vunpack.c.l.b16 %v257
    %v783 = vunpack.c.h.b16 %v257
    %v784 = vunpack.c.l.b16 %v258
    %v785 = vunpack.c.h.b16 %v258
    %v786 = vunpack.c.l.b16 %v259
    %v787 = vunpack.c.h.b16 %v259
    %v788 = vpack.c.b16 %v598, %v596
    %v789 = vpack.c.b16 %v599, %v597
    %v790 = vpack.c.b16 %v602, %v600
    %v791 = vpack.c.b16 %v603, %v601
    %v792 = vpack.c.b16 %v606, %v604
    %v793 = vpack.c.b16 %v607, %v605
    %v794 = vpack.c.b16 %v610, %v608
    %v795 = vpack.c.b16 %v611, %v609
    %v796 = vpack.c.b16 %v614, %v612
    %v797 = vpack.c.b16 %v615, %v613
    %v798 = vpack.c.b16 %v618, %v616
    %v799 = vpack.c.b16 %v619, %v617
    %v800 = vpack.c.b16 %v622, %v620
    %v801 = vpack.c.b16 %v623, %v621
    %v802 = vpack.c.b16 %v626, %v624
    %v803 = vpack.c.b16 %v627, %v625
    %v804 = vpack.c.b16 %v630, %v628
    %v805 = vpack.c.b16 %v631, %v629
    %v806 = vpack.c.b16 %v634, %v632
    %v807 = vpack.c.b16 %v635, %v633
    %v808 = vpack.c.b16 %v638, %v636
    %v809 = vpack.c.b16 %v639, %v637
    %v810 = vpack.c.b16 %v642, %v640
    %v811 = vpack.c.b16 %v643, %v641
    %v812 = vpack.c.b16 %v646, %v644
    %v813 = vpack.c.b16 %v647, %v645
    %v814 = vpack.c.b16 %v650, %v648
    %v815 = vpack.c.b16 %v651, %v649
    %v816 = vpack.c.b16 %v654, %v652
    %v817 = vpack.c.b16 %v655, %v653
    %v818 = vpack.c.b16 %v658, %v656
    %v819 = vpack.c.b16 %v659, %v657
    %v820 = vpack.c.b16 %v662, %v660
    %v821 = vpack.c.b16 %v663, %v661
    %v822 = vpack.c.b16 %v666, %v664
    %v823 = vpack.c.b16 %v667, %v665
    %v824 = vpack.c.b16 %v670, %v668
    %v825 = vpack.c.b16 %v671, %v669
    %v826 = vpack.c.b16 %v674, %v672
    %v827 = vpack.c.b16 %v675, %v673
    %v828 = vpack.c.b16 %v678, %v676
    %v829 = vpack.c.b16 %v679, %v677
    %v830 = vpack.c.b16 %v682, %v680
    %v831 = vpack.c.b16 %v683, %v681
    %v832 = vpack.c.b16 %v686, %v684
    %v833 = vpack.c.b16 %v687, %v685
    %v834 = vpack.c.b16 %v690, %v688
    %v835 = vpack.c.b16 %v691, %v689
    %v836 = vpack.c.b16 %v694, %v692
    %v837 = vpack.c.b16 %v695, %v693
    %v838 = vpack.c.b16 %v698, %v696
    %v839 = vpack.c.b16 %v699, %v697
    %v840 = vpack.c.b16 %v702, %v700
    %v841 = vpack.c.b16 %v703, %v701
    %v842 = vpack.c.b16 %v706, %v704
    %v843 = vpack.c.b16 %v707, %v705
    %v844 = vpack.c.b16 %v710, %v708
    %v845 = vpack.c.b16 %v711, %v709
    %v846 = vpack.c.b16 %v714, %v712
    %v847 = vpack.c.b16 %v715, %v713
    %v848 = vpack.c.b16 %v718, %v716
    %v849 = vpack.c.b16 %v719, %v717
    %v850 = vpack.c.b16 %v722, %v720
    %v851 = vpack.c.b16 %v723, %v721
    %v852 = vpack.c.b16 %v726, %v724
    %v853 = vpack.c.b16 %v727, %v725
    %v854 = vpack.c.b16 %v730, %v728
    %v855 = vpack.c.b16 %v731, %v729
    %v856 = vpack.c.b16 %v734, %v732
    %v857 = vpack.c.b16 %v735, %v733
    %v858 = vpack.c.b16 %v738, %v736
    %v859 = vpack.c.b16 %v739, %v737
    %v860 = vpack.c.b16 %v742, %v740
    %v861 = vpack.c.b16 %v743, %v741
    %v862 = vpack.c.b16 %v746, %v744
    %v863 = vpack.c.b16 %v747, %v745
    %v864 = vpack.c.b16 %v750, %v748
    %v865 = vpack.c.b16 %v751, %v749
    %v866 = vpack.c.b16 %v754, %v752
    %v867 = vpack.c.b16 %v755, %v753
    %v868 = vpack.c.b16 %v758, %v756
    %v869 = vpack.c.b16 %v759, %v757
    %v870 = vpack.c.b16 %v762, %v760
    %v871 = vpack.c.b16 %v763, %v761
    %v872 = vpack.c.b16 %v766, %v764
    %v873 = vpack.c.b16 %v767, %v765
    %v874 = vpack.c.b16 %v770, %v768
    %v875 = vpack.c.b16 %v771, %v769
    %v876 = vpack.c.b16 %v774, %v772
    %v877 = vpack.c.b16 %v775, %v773
    %v878 = vpack.c.b16 %v778, %v776
    %v879 = vpack.c.b16 %v779, %v777
    %v880 = vpack.c.b16 %v782, %v780
    %v881 = vpack.c.b16 %v783, %v781
    %v882 = vpack.c.b16 %v786, %v784
    %v883 = vpack.c.b16 %v787, %v785
    %980 = vmatpush.bf16.msra.mxu0 %v802
    %981 = vmatpush.bf16.msra.mxu0 %v800
    %982 = vmatpush.bf16.msra.mxu0 %v798
    %983 = vmatpush.bf16.msra.mxu0 %v796
    %984 = vmatpush.bf16.msra.mxu0 %v794
    %985 = vmatpush.bf16.msra.mxu0 %v792
    %986 = vmatpush.bf16.msra.mxu0 %v790
    %987 = vmatpush.bf16.msra.mxu0 %v788
    %988 = vmatmul.bf16.gmra.mxu0 %v404
    %v989 = vpop.f32.mrf.mxu0
    %v990 = vadd.f32 0.0, %v989
    %v991 = vpop.f32.mrf.mxu0
    %v992 = vadd.f32 0.0, %v991
    %993 = vmatmul.bf16.gmra.mxu0 %v410
    %v994 = vpop.f32.mrf.mxu0
    %v995 = vadd.f32 0.0, %v994
    %v996 = vpop.f32.mrf.mxu0
    %v997 = vadd.f32 0.0, %v996
    %998 = vmatmul.bf16.gmra.mxu0 %v416
    %v999 = vpop.f32.mrf.mxu0
    %v1000 = vadd.f32 0.0, %v999
    %v1001 = vpop.f32.mrf.mxu0
    %v1002 = vadd.f32 0.0, %v1001
    %1003 = vmatmul.bf16.gmra.mxu0 %v422
    %v1004 = vpop.f32.mrf.mxu0
    %v1005 = vadd.f32 0.0, %v1004
    %v1006 = vpop.f32.mrf.mxu0
    %v1007 = vadd.f32 0.0, %v1006
    %1008 = vmatmul.bf16.gmra.mxu0 %v428
    %v1009 = vpop.f32.mrf.mxu0
    %v1010 = vadd.f32 0.0, %v1009
    %v1011 = vpop.f32.mrf.mxu0
    %v1012 = vadd.f32 0.0, %v1011
    %1013 = vmatmul.bf16.gmra.mxu0 %v434
    %v1014 = vpop.f32.mrf.mxu0
    %v1015 = vadd.f32 0.0, %v1014
    %v1016 = vpop.f32.mrf.mxu0
    %v1017 = vadd.f32 0.0, %v1016
    %1018 = vmatmul.bf16.gmra.mxu0 %v440
    %v1019 = vpop.f32.mrf.mxu0
    %v1020 = vadd.f32 0.0, %v1019
    %v1021 = vpop.f32.mrf.mxu0
    %v1022 = vadd.f32 0.0, %v1021
    %1023 = vmatmul.bf16.gmra.mxu0 %v446
    %v1024 = vpop.f32.mrf.mxu0
    %v1025 = vadd.f32 0.0, %v1024
    %v1026 = vpop.f32.mrf.mxu0
    %v1027 = vadd.f32 0.0, %v1026
    %1028 = vdwg.mxu0
    %1029 = vmatpush.bf16.msra.mxu0 %v818
    %1030 = vmatpush.bf16.msra.mxu0 %v816
    %1031 = vmatpush.bf16.msra.mxu0 %v814
    %1032 = vmatpush.bf16.msra.mxu0 %v812
    %1033 = vmatpush.bf16.msra.mxu0 %v810
    %1034 = vmatpush.bf16.msra.mxu0 %v808
    %1035 = vmatpush.bf16.msra.mxu0 %v806
    %1036 = vmatpush.bf16.msra.mxu0 %v804
    %1037 = vmatmul.bf16.gmra.mxu0 %v405
    %v1038 = vpop.f32.mrf.mxu0
    %v1039 = vadd.f32 %v990, %v1038
    %v1040 = vpop.f32.mrf.mxu0
    %v1041 = vadd.f32 %v992, %v1040
    %1042 = vmatmul.bf16.gmra.mxu0 %v411
    %v1043 = vpop.f32.mrf.mxu0
    %v1044 = vadd.f32 %v995, %v1043
    %v1045 = vpop.f32.mrf.mxu0
    %v1046 = vadd.f32 %v997, %v1045
    %1047 = vmatmul.bf16.gmra.mxu0 %v417
    %v1048 = vpop.f32.mrf.mxu0
    %v1049 = vadd.f32 %v1000, %v1048
    %v1050 = vpop.f32.mrf.mxu0
    %v1051 = vadd.f32 %v1002, %v1050
    %1052 = vmatmul.bf16.gmra.mxu0 %v423
    %v1053 = vpop.f32.mrf.mxu0
    %v1054 = vadd.f32 %v1005, %v1053
    %v1055 = vpop.f32.mrf.mxu0
    %v1056 = vadd.f32 %v1007, %v1055
    %1057 = vmatmul.bf16.gmra.mxu0 %v429
    %v1058 = vpop.f32.mrf.mxu0
    %v1059 = vadd.f32 %v1010, %v1058
    %v1060 = vpop.f32.mrf.mxu0
    %v1061 = vadd.f32 %v1012, %v1060
    %1062 = vmatmul.bf16.gmra.mxu0 %v435
    %v1063 = vpop.f32.mrf.mxu0
    %v1064 = vadd.f32 %v1015, %v1063
    %v1065 = vpop.f32.mrf.mxu0
    %v1066 = vadd.f32 %v1017, %v1065
    %1067 = vmatmul.bf16.gmra.mxu0 %v441
    %v1068 = vpop.f32.mrf.mxu0
    %v1069 = vadd.f32 %v1020, %v1068
    %v1070 = vpop.f32.mrf.mxu0
    %v1071 = vadd.f32 %v1022, %v1070
    %1072 = vmatmul.bf16.gmra.mxu0 %v447
    %v1073 = vpop.f32.mrf.mxu0
    %v1074 = vadd.f32 %v1025, %v1073
    %v1075 = vpop.f32.mrf.mxu0
    %v1076 = vadd.f32 %v1027, %v1075
    %1077 = vdwg.mxu0
    %1078 = vmatpush.bf16.msra.mxu0 %v834
    %1079 = vmatpush.bf16.msra.mxu0 %v832
    %1080 = vmatpush.bf16.msra.mxu0 %v830
    %1081 = vmatpush.bf16.msra.mxu0 %v828
    %1082 = vmatpush.bf16.msra.mxu0 %v826
    %1083 = vmatpush.bf16.msra.mxu0 %v824
    %1084 = vmatpush.bf16.msra.mxu0 %v822
    %1085 = vmatpush.bf16.msra.mxu0 %v820
    %1086 = vmatmul.bf16.gmra.mxu0 %v406
    %v1087 = vpop.f32.mrf.mxu0
    %v1088 = vadd.f32 %v1039, %v1087
    %v1089 = vpop.f32.mrf.mxu0
    %v1090 = vadd.f32 %v1041, %v1089
    %1091 = vmatmul.bf16.gmra.mxu0 %v412
    %v1092 = vpop.f32.mrf.mxu0
    %v1093 = vadd.f32 %v1044, %v1092
    %v1094 = vpop.f32.mrf.mxu0
    %v1095 = vadd.f32 %v1046, %v1094
    %1096 = vmatmul.bf16.gmra.mxu0 %v418
    %v1097 = vpop.f32.mrf.mxu0
    %v1098 = vadd.f32 %v1049, %v1097
    %v1099 = vpop.f32.mrf.mxu0
    %v1100 = vadd.f32 %v1051, %v1099
    %1101 = vmatmul.bf16.gmra.mxu0 %v424
    %v1102 = vpop.f32.mrf.mxu0
    %v1103 = vadd.f32 %v1054, %v1102
    %v1104 = vpop.f32.mrf.mxu0
    %v1105 = vadd.f32 %v1056, %v1104
    %1106 = vmatmul.bf16.gmra.mxu0 %v430
    %v1107 = vpop.f32.mrf.mxu0
    %v1108 = vadd.f32 %v1059, %v1107
    %v1109 = vpop.f32.mrf.mxu0
    %v1110 = vadd.f32 %v1061, %v1109
    %1111 = vmatmul.bf16.gmra.mxu0 %v436
    %v1112 = vpop.f32.mrf.mxu0
    %v1113 = vadd.f32 %v1064, %v1112
    %v1114 = vpop.f32.mrf.mxu0
    %v1115 = vadd.f32 %v1066, %v1114
    %1116 = vmatmul.bf16.gmra.mxu0 %v442
    %v1117 = vpop.f32.mrf.mxu0
    %v1118 = vadd.f32 %v1069, %v1117
    %v1119 = vpop.f32.mrf.mxu0
    %v1120 = vadd.f32 %v1071, %v1119
    %1121 = vmatmul.bf16.gmra.mxu0 %v448
    %v1122 = vpop.f32.mrf.mxu0
    %v1123 = vadd.f32 %v1074, %v1122
    %v1124 = vpop.f32.mrf.mxu0
    %v1125 = vadd.f32 %v1076, %v1124
    %1126 = vdwg.mxu0
    %1127 = vmatpush.bf16.msra.mxu0 %v850
    %1128 = vmatpush.bf16.msra.mxu0 %v848
    %1129 = vmatpush.bf16.msra.mxu0 %v846
    %1130 = vmatpush.bf16.msra.mxu0 %v844
    %1131 = vmatpush.bf16.msra.mxu0 %v842
    %1132 = vmatpush.bf16.msra.mxu0 %v840
    %1133 = vmatpush.bf16.msra.mxu0 %v838
    %1134 = vmatpush.bf16.msra.mxu0 %v836
    %1135 = vmatmul.bf16.gmra.mxu0 %v407
    %v1136 = vpop.f32.mrf.mxu0
    %v1137 = vadd.f32 %v1088, %v1136
    %v1138 = vpop.f32.mrf.mxu0
    %v1139 = vadd.f32 %v1090, %v1138
    %1140 = vmatmul.bf16.gmra.mxu0 %v413
    %v1141 = vpop.f32.mrf.mxu0
    %v1142 = vadd.f32 %v1093, %v1141
    %v1143 = vpop.f32.mrf.mxu0
    %v1144 = vadd.f32 %v1095, %v1143
    %1145 = vmatmul.bf16.gmra.mxu0 %v419
    %v1146 = vpop.f32.mrf.mxu0
    %v1147 = vadd.f32 %v1098, %v1146
    %v1148 = vpop.f32.mrf.mxu0
    %v1149 = vadd.f32 %v1100, %v1148
    %1150 = vmatmul.bf16.gmra.mxu0 %v425
    %v1151 = vpop.f32.mrf.mxu0
    %v1152 = vadd.f32 %v1103, %v1151
    %v1153 = vpop.f32.mrf.mxu0
    %v1154 = vadd.f32 %v1105, %v1153
    %1155 = vmatmul.bf16.gmra.mxu0 %v431
    %v1156 = vpop.f32.mrf.mxu0
    %v1157 = vadd.f32 %v1108, %v1156
    %v1158 = vpop.f32.mrf.mxu0
    %v1159 = vadd.f32 %v1110, %v1158
    %1160 = vmatmul.bf16.gmra.mxu0 %v437
    %v1161 = vpop.f32.mrf.mxu0
    %v1162 = vadd.f32 %v1113, %v1161
    %v1163 = vpop.f32.mrf.mxu0
    %v1164 = vadd.f32 %v1115, %v1163
    %1165 = vmatmul.bf16.gmra.mxu0 %v443
    %v1166 = vpop.f32.mrf.mxu0
    %v1167 = vadd.f32 %v1118, %v1166
    %v1168 = vpop.f32.mrf.mxu0
    %v1169 = vadd.f32 %v1120, %v1168
    %1170 = vmatmul.bf16.gmra.mxu0 %v449
    %v1171 = vpop.f32.mrf.mxu0
    %v1172 = vadd.f32 %v1123, %v1171
    %v1173 = vpop.f32.mrf.mxu0
    %v1174 = vadd.f32 %v1125, %v1173
    %1175 = vdwg.mxu0
    %1176 = vmatpush.bf16.msra.mxu0 %v866
    %1177 = vmatpush.bf16.msra.mxu0 %v864
    %1178 = vmatpush.bf16.msra.mxu0 %v862
    %1179 = vmatpush.bf16.msra.mxu0 %v860
    %1180 = vmatpush.bf16.msra.mxu0 %v858
    %1181 = vmatpush.bf16.msra.mxu0 %v856
    %1182 = vmatpush.bf16.msra.mxu0 %v854
    %1183 = vmatpush.bf16.msra.mxu0 %v852
    %1184 = vmatmul.bf16.gmra.mxu0 %v408
    %v1185 = vpop.f32.mrf.mxu0
    %v1186 = vadd.f32 %v1137, %v1185
    %v1187 = vpop.f32.mrf.mxu0
    %v1188 = vadd.f32 %v1139, %v1187
    %1189 = vmatmul.bf16.gmra.mxu0 %v414
    %v1190 = vpop.f32.mrf.mxu0
    %v1191 = vadd.f32 %v1142, %v1190
    %v1192 = vpop.f32.mrf.mxu0
    %v1193 = vadd.f32 %v1144, %v1192
    %1194 = vmatmul.bf16.gmra.mxu0 %v420
    %v1195 = vpop.f32.mrf.mxu0
    %v1196 = vadd.f32 %v1147, %v1195
    %v1197 = vpop.f32.mrf.mxu0
    %v1198 = vadd.f32 %v1149, %v1197
    %1199 = vmatmul.bf16.gmra.mxu0 %v426
    %v1200 = vpop.f32.mrf.mxu0
    %v1201 = vadd.f32 %v1152, %v1200
    %v1202 = vpop.f32.mrf.mxu0
    %v1203 = vadd.f32 %v1154, %v1202
    %1204 = vmatmul.bf16.gmra.mxu0 %v432
    %v1205 = vpop.f32.mrf.mxu0
    %v1206 = vadd.f32 %v1157, %v1205
    %v1207 = vpop.f32.mrf.mxu0
    %v1208 = vadd.f32 %v1159, %v1207
    %1209 = vmatmul.bf16.gmra.mxu0 %v438
    %v1210 = vpop.f32.mrf.mxu0
    %v1211 = vadd.f32 %v1162, %v1210
    %v1212 = vpop.f32.mrf.mxu0
    %v1213 = vadd.f32 %v1164, %v1212
    %1214 = vmatmul.bf16.gmra.mxu0 %v444
    %v1215 = vpop.f32.mrf.mxu0
    %v1216 = vadd.f32 %v1167, %v1215
    %v1217 = vpop.f32.mrf.mxu0
    %v1218 = vadd.f32 %v1169, %v1217
    %1219 = vmatmul.bf16.gmra.mxu0 %v450
    %v1220 = vpop.f32.mrf.mxu0
    %v1221 = vadd.f32 %v1172, %v1220
    %v1222 = vpop.f32.mrf.mxu0
    %v1223 = vadd.f32 %v1174, %v1222
    %1224 = vdwg.mxu0
    %1225 = vmatpush.bf16.msra.mxu0 %v882
    %1226 = vmatpush.bf16.msra.mxu0 %v880
    %1227 = vmatpush.bf16.msra.mxu0 %v878
    %1228 = vmatpush.bf16.msra.mxu0 %v876
    %1229 = vmatpush.bf16.msra.mxu0 %v874
    %1230 = vmatpush.bf16.msra.mxu0 %v872
    %1231 = vmatpush.bf16.msra.mxu0 %v870
    %1232 = vmatpush.bf16.msra.mxu0 %v868
    %1233 = vmatmul.bf16.gmra.mxu0 %v409
    %v1234 = vpop.f32.mrf.mxu0
    %v1235 = vadd.f32 %v1186, %v1234
    %v1236 = vpop.f32.mrf.mxu0
    %v1237 = vadd.f32 %v1188, %v1236
    %1238 = vmatmul.bf16.gmra.mxu0 %v415
    %v1239 = vpop.f32.mrf.mxu0
    %v1240 = vadd.f32 %v1191, %v1239
    %v1241 = vpop.f32.mrf.mxu0
    %v1242 = vadd.f32 %v1193, %v1241
    %1243 = vmatmul.bf16.gmra.mxu0 %v421
    %v1244 = vpop.f32.mrf.mxu0
    %v1245 = vadd.f32 %v1196, %v1244
    %v1246 = vpop.f32.mrf.mxu0
    %v1247 = vadd.f32 %v1198, %v1246
    %1248 = vmatmul.bf16.gmra.mxu0 %v427
    %v1249 = vpop.f32.mrf.mxu0
    %v1250 = vadd.f32 %v1201, %v1249
    %v1251 = vpop.f32.mrf.mxu0
    %v1252 = vadd.f32 %v1203, %v1251
    %1253 = vmatmul.bf16.gmra.mxu0 %v433
    %v1254 = vpop.f32.mrf.mxu0
    %v1255 = vadd.f32 %v1206, %v1254
    %v1256 = vpop.f32.mrf.mxu0
    %v1257 = vadd.f32 %v1208, %v1256
    %1258 = vmatmul.bf16.gmra.mxu0 %v439
    %v1259 = vpop.f32.mrf.mxu0
    %v1260 = vadd.f32 %v1211, %v1259
    %v1261 = vpop.f32.mrf.mxu0
    %v1262 = vadd.f32 %v1213, %v1261
    %1263 = vmatmul.bf16.gmra.mxu0 %v445
    %v1264 = vpop.f32.mrf.mxu0
    %v1265 = vadd.f32 %v1216, %v1264
    %v1266 = vpop.f32.mrf.mxu0
    %v1267 = vadd.f32 %v1218, %v1266
    %1268 = vmatmul.bf16.gmra.mxu0 %v451
    %v1269 = vpop.f32.mrf.mxu0
    %v1270 = vadd.f32 %v1221, %v1269
    %v1271 = vpop.f32.mrf.mxu0
    %v1272 = vadd.f32 %v1223, %v1271
    %1273 = vdwg.mxu0
    %1274 = vmatpush.bf16.msra.mxu0 %v803
    %1275 = vmatpush.bf16.msra.mxu0 %v801
    %1276 = vmatpush.bf16.msra.mxu0 %v799
    %1277 = vmatpush.bf16.msra.mxu0 %v797
    %1278 = vmatpush.bf16.msra.mxu0 %v795
    %1279 = vmatpush.bf16.msra.mxu0 %v793
    %1280 = vmatpush.bf16.msra.mxu0 %v791
    %1281 = vmatpush.bf16.msra.mxu0 %v789
    %1282 = vmatmul.bf16.gmra.mxu0 %v404
    %v1283 = vpop.f32.mrf.mxu0
    %v1284 = vadd.f32 0.0, %v1283
    %v1285 = vpop.f32.mrf.mxu0
    %v1286 = vadd.f32 0.0, %v1285
    %1287 = vmatmul.bf16.gmra.mxu0 %v410
    %v1288 = vpop.f32.mrf.mxu0
    %v1289 = vadd.f32 0.0, %v1288
    %v1290 = vpop.f32.mrf.mxu0
    %v1291 = vadd.f32 0.0, %v1290
    %1292 = vmatmul.bf16.gmra.mxu0 %v416
    %v1293 = vpop.f32.mrf.mxu0
    %v1294 = vadd.f32 0.0, %v1293
    %v1295 = vpop.f32.mrf.mxu0
    %v1296 = vadd.f32 0.0, %v1295
    %1297 = vmatmul.bf16.gmra.mxu0 %v422
    %v1298 = vpop.f32.mrf.mxu0
    %v1299 = vadd.f32 0.0, %v1298
    %v1300 = vpop.f32.mrf.mxu0
    %v1301 = vadd.f32 0.0, %v1300
    %1302 = vmatmul.bf16.gmra.mxu0 %v428
    %v1303 = vpop.f32.mrf.mxu0
    %v1304 = vadd.f32 0.0, %v1303
    %v1305 = vpop.f32.mrf.mxu0
    %v1306 = vadd.f32 0.0, %v1305
    %1307 = vmatmul.bf16.gmra.mxu0 %v434
    %v1308 = vpop.f32.mrf.mxu0
    %v1309 = vadd.f32 0.0, %v1308
    %v1310 = vpop.f32.mrf.mxu0
    %v1311 = vadd.f32 0.0, %v1310
    %1312 = vmatmul.bf16.gmra.mxu0 %v440
    %v1313 = vpop.f32.mrf.mxu0
    %v1314 = vadd.f32 0.0, %v1313
    %v1315 = vpop.f32.mrf.mxu0
    %v1316 = vadd.f32 0.0, %v1315
    %1317 = vmatmul.bf16.gmra.mxu0 %v446
    %v1318 = vpop.f32.mrf.mxu0
    %v1319 = vadd.f32 0.0, %v1318
    %v1320 = vpop.f32.mrf.mxu0
    %v1321 = vadd.f32 0.0, %v1320
    %1322 = vdwg.mxu0
    %1323 = vmatpush.bf16.msra.mxu0 %v819
    %1324 = vmatpush.bf16.msra.mxu0 %v817
    %1325 = vmatpush.bf16.msra.mxu0 %v815
    %1326 = vmatpush.bf16.msra.mxu0 %v813
    %1327 = vmatpush.bf16.msra.mxu0 %v811
    %1328 = vmatpush.bf16.msra.mxu0 %v809
    %1329 = vmatpush.bf16.msra.mxu0 %v807
    %1330 = vmatpush.bf16.msra.mxu0 %v805
    %1331 = vmatmul.bf16.gmra.mxu0 %v405
    %v1332 = vpop.f32.mrf.mxu0
    %v1333 = vadd.f32 %v1284, %v1332
    %v1334 = vpop.f32.mrf.mxu0
    %v1335 = vadd.f32 %v1286, %v1334
    %1336 = vmatmul.bf16.gmra.mxu0 %v411
    %v1337 = vpop.f32.mrf.mxu0
    %v1338 = vadd.f32 %v1289, %v1337
    %v1339 = vpop.f32.mrf.mxu0
    %v1340 = vadd.f32 %v1291, %v1339
    %1341 = vmatmul.bf16.gmra.mxu0 %v417
    %v1342 = vpop.f32.mrf.mxu0
    %v1343 = vadd.f32 %v1294, %v1342
    %v1344 = vpop.f32.mrf.mxu0
    %v1345 = vadd.f32 %v1296, %v1344
    %1346 = vmatmul.bf16.gmra.mxu0 %v423
    %v1347 = vpop.f32.mrf.mxu0
    %v1348 = vadd.f32 %v1299, %v1347
    %v1349 = vpop.f32.mrf.mxu0
    %v1350 = vadd.f32 %v1301, %v1349
    %1351 = vmatmul.bf16.gmra.mxu0 %v429
    %v1352 = vpop.f32.mrf.mxu0
    %v1353 = vadd.f32 %v1304, %v1352
    %v1354 = vpop.f32.mrf.mxu0
    %v1355 = vadd.f32 %v1306, %v1354
    %1356 = vmatmul.bf16.gmra.mxu0 %v435
    %v1357 = vpop.f32.mrf.mxu0
    %v1358 = vadd.f32 %v1309, %v1357
    %v1359 = vpop.f32.mrf.mxu0
    %v1360 = vadd.f32 %v1311, %v1359
    %1361 = vmatmul.bf16.gmra.mxu0 %v441
    %v1362 = vpop.f32.mrf.mxu0
    %v1363 = vadd.f32 %v1314, %v1362
    %v1364 = vpop.f32.mrf.mxu0
    %v1365 = vadd.f32 %v1316, %v1364
    %1366 = vmatmul.bf16.gmra.mxu0 %v447
    %v1367 = vpop.f32.mrf.mxu0
    %v1368 = vadd.f32 %v1319, %v1367
    %v1369 = vpop.f32.mrf.mxu0
    %v1370 = vadd.f32 %v1321, %v1369
    %1371 = vdwg.mxu0
    %1372 = vmatpush.bf16.msra.mxu0 %v835
    %1373 = vmatpush.bf16.msra.mxu0 %v833
    %1374 = vmatpush.bf16.msra.mxu0 %v831
    %1375 = vmatpush.bf16.msra.mxu0 %v829
    %1376 = vmatpush.bf16.msra.mxu0 %v827
    %1377 = vmatpush.bf16.msra.mxu0 %v825
    %1378 = vmatpush.bf16.msra.mxu0 %v823
    %1379 = vmatpush.bf16.msra.mxu0 %v821
    %1380 = vmatmul.bf16.gmra.mxu0 %v406
    %v1381 = vpop.f32.mrf.mxu0
    %v1382 = vadd.f32 %v1333, %v1381
    %v1383 = vpop.f32.mrf.mxu0
    %v1384 = vadd.f32 %v1335, %v1383
    %1385 = vmatmul.bf16.gmra.mxu0 %v412
    %v1386 = vpop.f32.mrf.mxu0
    %v1387 = vadd.f32 %v1338, %v1386
    %v1388 = vpop.f32.mrf.mxu0
    %v1389 = vadd.f32 %v1340, %v1388
    %1390 = vmatmul.bf16.gmra.mxu0 %v418
    %v1391 = vpop.f32.mrf.mxu0
    %v1392 = vadd.f32 %v1343, %v1391
    %v1393 = vpop.f32.mrf.mxu0
    %v1394 = vadd.f32 %v1345, %v1393
    %1395 = vmatmul.bf16.gmra.mxu0 %v424
    %v1396 = vpop.f32.mrf.mxu0
    %v1397 = vadd.f32 %v1348, %v1396
    %v1398 = vpop.f32.mrf.mxu0
    %v1399 = vadd.f32 %v1350, %v1398
    %1400 = vmatmul.bf16.gmra.mxu0 %v430
    %v1401 = vpop.f32.mrf.mxu0
    %v1402 = vadd.f32 %v1353, %v1401
    %v1403 = vpop.f32.mrf.mxu0
    %v1404 = vadd.f32 %v1355, %v1403
    %1405 = vmatmul.bf16.gmra.mxu0 %v436
    %v1406 = vpop.f32.mrf.mxu0
    %v1407 = vadd.f32 %v1358, %v1406
    %v1408 = vpop.f32.mrf.mxu0
    %v1409 = vadd.f32 %v1360, %v1408
    %1410 = vmatmul.bf16.gmra.mxu0 %v442
    %v1411 = vpop.f32.mrf.mxu0
    %v1412 = vadd.f32 %v1363, %v1411
    %v1413 = vpop.f32.mrf.mxu0
    %v1414 = vadd.f32 %v1365, %v1413
    %1415 = vmatmul.bf16.gmra.mxu0 %v448
    %v1416 = vpop.f32.mrf.mxu0
    %v1417 = vadd.f32 %v1368, %v1416
    %v1418 = vpop.f32.mrf.mxu0
    %v1419 = vadd.f32 %v1370, %v1418
    %1420 = vdwg.mxu0
    %1421 = vmatpush.bf16.msra.mxu0 %v851
    %1422 = vmatpush.bf16.msra.mxu0 %v849
    %1423 = vmatpush.bf16.msra.mxu0 %v847
    %1424 = vmatpush.bf16.msra.mxu0 %v845
    %1425 = vmatpush.bf16.msra.mxu0 %v843
    %1426 = vmatpush.bf16.msra.mxu0 %v841
    %1427 = vmatpush.bf16.msra.mxu0 %v839
    %1428 = vmatpush.bf16.msra.mxu0 %v837
    %1429 = vmatmul.bf16.gmra.mxu0 %v407
    %v1430 = vpop.f32.mrf.mxu0
    %v1431 = vadd.f32 %v1382, %v1430
    %v1432 = vpop.f32.mrf.mxu0
    %v1433 = vadd.f32 %v1384, %v1432
    %1434 = vmatmul.bf16.gmra.mxu0 %v413
    %v1435 = vpop.f32.mrf.mxu0
    %v1436 = vadd.f32 %v1387, %v1435
    %v1437 = vpop.f32.mrf.mxu0
    %v1438 = vadd.f32 %v1389, %v1437
    %1439 = vmatmul.bf16.gmra.mxu0 %v419
    %v1440 = vpop.f32.mrf.mxu0
    %v1441 = vadd.f32 %v1392, %v1440
    %v1442 = vpop.f32.mrf.mxu0
    %v1443 = vadd.f32 %v1394, %v1442
    %1444 = vmatmul.bf16.gmra.mxu0 %v425
    %v1445 = vpop.f32.mrf.mxu0
    %v1446 = vadd.f32 %v1397, %v1445
    %v1447 = vpop.f32.mrf.mxu0
    %v1448 = vadd.f32 %v1399, %v1447
    %1449 = vmatmul.bf16.gmra.mxu0 %v431
    %v1450 = vpop.f32.mrf.mxu0
    %v1451 = vadd.f32 %v1402, %v1450
    %v1452 = vpop.f32.mrf.mxu0
    %v1453 = vadd.f32 %v1404, %v1452
    %1454 = vmatmul.bf16.gmra.mxu0 %v437
    %v1455 = vpop.f32.mrf.mxu0
    %v1456 = vadd.f32 %v1407, %v1455
    %v1457 = vpop.f32.mrf.mxu0
    %v1458 = vadd.f32 %v1409, %v1457
    %1459 = vmatmul.bf16.gmra.mxu0 %v443
    %v1460 = vpop.f32.mrf.mxu0
    %v1461 = vadd.f32 %v1412, %v1460
    %v1462 = vpop.f32.mrf.mxu0
    %v1463 = vadd.f32 %v1414, %v1462
    %1464 = vmatmul.bf16.gmra.mxu0 %v449
    %v1465 = vpop.f32.mrf.mxu0
    %v1466 = vadd.f32 %v1417, %v1465
    %v1467 = vpop.f32.mrf.mxu0
    %v1468 = vadd.f32 %v1419, %v1467
    %1469 = vdwg.mxu0
    %1470 = vmatpush.bf16.msra.mxu0 %v867
    %1471 = vmatpush.bf16.msra.mxu0 %v865
    %1472 = vmatpush.bf16.msra.mxu0 %v863
    %1473 = vmatpush.bf16.msra.mxu0 %v861
    %1474 = vmatpush.bf16.msra.mxu0 %v859
    %1475 = vmatpush.bf16.msra.mxu0 %v857
    %1476 = vmatpush.bf16.msra.mxu0 %v855
    %1477 = vmatpush.bf16.msra.mxu0 %v853
    %1478 = vmatmul.bf16.gmra.mxu0 %v408
    %v1479 = vpop.f32.mrf.mxu0
    %v1480 = vadd.f32 %v1431, %v1479
    %v1481 = vpop.f32.mrf.mxu0
    %v1482 = vadd.f32 %v1433, %v1481
    %1483 = vmatmul.bf16.gmra.mxu0 %v414
    %v1484 = vpop.f32.mrf.mxu0
    %v1485 = vadd.f32 %v1436, %v1484
    %v1486 = vpop.f32.mrf.mxu0
    %v1487 = vadd.f32 %v1438, %v1486
    %1488 = vmatmul.bf16.gmra.mxu0 %v420
    %v1489 = vpop.f32.mrf.mxu0
    %v1490 = vadd.f32 %v1441, %v1489
    %v1491 = vpop.f32.mrf.mxu0
    %v1492 = vadd.f32 %v1443, %v1491
    %1493 = vmatmul.bf16.gmra.mxu0 %v426
    %v1494 = vpop.f32.mrf.mxu0
    %v1495 = vadd.f32 %v1446, %v1494
    %v1496 = vpop.f32.mrf.mxu0
    %v1497 = vadd.f32 %v1448, %v1496
    %1498 = vmatmul.bf16.gmra.mxu0 %v432
    %v1499 = vpop.f32.mrf.mxu0
    %v1500 = vadd.f32 %v1451, %v1499
    %v1501 = vpop.f32.mrf.mxu0
    %v1502 = vadd.f32 %v1453, %v1501
    %1503 = vmatmul.bf16.gmra.mxu0 %v438
    %v1504 = vpop.f32.mrf.mxu0
    %v1505 = vadd.f32 %v1456, %v1504
    %v1506 = vpop.f32.mrf.mxu0
    %v1507 = vadd.f32 %v1458, %v1506
    %1508 = vmatmul.bf16.gmra.mxu0 %v444
    %v1509 = vpop.f32.mrf.mxu0
    %v1510 = vadd.f32 %v1461, %v1509
    %v1511 = vpop.f32.mrf.mxu0
    %v1512 = vadd.f32 %v1463, %v1511
    %1513 = vmatmul.bf16.gmra.mxu0 %v450
    %v1514 = vpop.f32.mrf.mxu0
    %v1515 = vadd.f32 %v1466, %v1514
    %v1516 = vpop.f32.mrf.mxu0
    %v1517 = vadd.f32 %v1468, %v1516
    %1518 = vdwg.mxu0
    %1519 = vmatpush.bf16.msra.mxu0 %v883
    %1520 = vmatpush.bf16.msra.mxu0 %v881
    %1521 = vmatpush.bf16.msra.mxu0 %v879
    %1522 = vmatpush.bf16.msra.mxu0 %v877
    %1523 = vmatpush.bf16.msra.mxu0 %v875
    %1524 = vmatpush.bf16.msra.mxu0 %v873
    %1525 = vmatpush.bf16.msra.mxu0 %v871
    %1526 = vmatpush.bf16.msra.mxu0 %v869
    %1527 = vmatmul.bf16.gmra.mxu0 %v409
    %v1528 = vpop.f32.mrf.mxu0
    %v1529 = vadd.f32 %v1480, %v1528
    %v1530 = vpop.f32.mrf.mxu0
    %v1531 = vadd.f32 %v1482, %v1530
    %1532 = vmatmul.bf16.gmra.mxu0 %v415
    %v1533 = vpop.f32.mrf.mxu0
    %v1534 = vadd.f32 %v1485, %v1533
    %v1535 = vpop.f32.mrf.mxu0
    %v1536 = vadd.f32 %v1487, %v1535
    %1537 = vmatmul.bf16.gmra.mxu0 %v421
    %v1538 = vpop.f32.mrf.mxu0
    %v1539 = vadd.f32 %v1490, %v1538
    %v1540 = vpop.f32.mrf.mxu0
    %v1541 = vadd.f32 %v1492, %v1540
    %1542 = vmatmul.bf16.gmra.mxu0 %v427
    %v1543 = vpop.f32.mrf.mxu0
    %v1544 = vadd.f32 %v1495, %v1543
    %v1545 = vpop.f32.mrf.mxu0
    %v1546 = vadd.f32 %v1497, %v1545
    %1547 = vmatmul.bf16.gmra.mxu0 %v433
    %v1548 = vpop.f32.mrf.mxu0
    %v1549 = vadd.f32 %v1500, %v1548
    %v1550 = vpop.f32.mrf.mxu0
    %v1551 = vadd.f32 %v1502, %v1550
    %1552 = vmatmul.bf16.gmra.mxu0 %v439
    %v1553 = vpop.f32.mrf.mxu0
    %v1554 = vadd.f32 %v1505, %v1553
    %v1555 = vpop.f32.mrf.mxu0
    %v1556 = vadd.f32 %v1507, %v1555
    %1557 = vmatmul.bf16.gmra.mxu0 %v445
    %v1558 = vpop.f32.mrf.mxu0
    %v1559 = vadd.f32 %v1510, %v1558
    %v1560 = vpop.f32.mrf.mxu0
    %v1561 = vadd.f32 %v1512, %v1560
    %1562 = vmatmul.bf16.gmra.mxu0 %v451
    %v1563 = vpop.f32.mrf.mxu0
    %v1564 = vadd.f32 %v1515, %v1563
    %v1565 = vpop.f32.mrf.mxu0
    %v1566 = vadd.f32 %v1517, %v1565
    %1567 = vdwg.mxu0
    %1568 = vst [vmem:[#allocation2 + $0x10] sm:$0xff] %v1235
    %1569 = vst [vmem:[#allocation2 + $0x18] sm:$0xff] %v1529
    %1570 = vst [vmem:[#allocation2 + $0x20] sm:$0xff] %v1237
    %1571 = vst [vmem:[#allocation2 + $0x28] sm:$0xff] %v1531
    %1572 = vst [vmem:[#allocation2 + $0x50] sm:$0xff] %v1240
    %1573 = vst [vmem:[#allocation2 + $0x58] sm:$0xff] %v1534
    %1574 = vst [vmem:[#allocation2 + $0x60] sm:$0xff] %v1242
    %1575 = vst [vmem:[#allocation2 + $0x68] sm:$0xff] %v1536
    %1576 = vst [vmem:[#allocation2 + $0x90] sm:$0xff] %v1245
    %1577 = vst [vmem:[#allocation2 + $0x98] sm:$0xff] %v1539
    %1578 = vst [vmem:[#allocation2 + $0xa0] sm:$0xff] %v1247
    %1579 = vst [vmem:[#allocation2 + $0xa8] sm:$0xff] %v1541
    %1580 = vst [vmem:[#allocation2 + $0xd0] sm:$0xff] %v1250
    %1581 = vst [vmem:[#allocation2 + $0xd8] sm:$0xff] %v1544
    %1582 = vst [vmem:[#allocation2 + $0xe0] sm:$0xff] %v1252
    %1583 = vst [vmem:[#allocation2 + $0xe8] sm:$0xff] %v1546
    %1584 = vst [vmem:[#allocation2 + $0x110] sm:$0xff] %v1255
    %1585 = vst [vmem:[#allocation2 + $0x118] sm:$0xff] %v1549
    %1586 = vst [vmem:[#allocation2 + $0x120] sm:$0xff] %v1257
    %1587 = vst [vmem:[#allocation2 + $0x128] sm:$0xff] %v1551
    %1588 = vst [vmem:[#allocation2 + $0x150] sm:$0xff] %v1260
    %1589 = vst [vmem:[#allocation2 + $0x158] sm:$0xff] %v1554
    %1590 = vst [vmem:[#allocation2 + $0x160] sm:$0xff] %v1262
    %1591 = vst [vmem:[#allocation2 + $0x168] sm:$0xff] %v1556
    %1592 = vst [vmem:[#allocation2 + $0x190] sm:$0xff] %v1265
    %1593 = vst [vmem:[#allocation2 + $0x198] sm:$0xff] %v1559
    %1594 = vst [vmem:[#allocation2 + $0x1a0] sm:$0xff] %v1267
    %1595 = vst [vmem:[#allocation2 + $0x1a8] sm:$0xff] %v1561
    %1596 = vst [vmem:[#allocation2 + $0x1d0] sm:$0xff] %v1270
    %1597 = vst [vmem:[#allocation2 + $0x1d8] sm:$0xff] %v1564
    %1598 = vst [vmem:[#allocation2 + $0x1e0] sm:$0xff] %v1272
    %1599 = vst [vmem:[#allocation2 + $0x1e8] sm:$0xff] %v1566
    %v1600 = vld [vmem:[#allocation2] sm:$0xff]
    %v1601 = vld [vmem:[#allocation2 + $0x10] sm:$0xff]
    %v1602 = vld [vmem:[#allocation2 + $0x20] sm:$0xff]
    %v1603 = vld [vmem:[#allocation2 + $0x40] sm:$0xff]
    %v1604 = vld [vmem:[#allocation2 + $0x50] sm:$0xff]
    %v1605 = vld [vmem:[#allocation2 + $0x60] sm:$0xff]
    %v1606 = vld [vmem:[#allocation2 + $0x80] sm:$0xff]
    %v1607 = vld [vmem:[#allocation2 + $0x90] sm:$0xff]
    %v1608 = vld [vmem:[#allocation2 + $0xa0] sm:$0xff]
    %v1609 = vld [vmem:[#allocation2 + $0xc0] sm:$0xff]
    %v1610 = vld [vmem:[#allocation2 + $0xd0] sm:$0xff]
    %v1611 = vld [vmem:[#allocation2 + $0xe0] sm:$0xff]
    %v1612 = vld [vmem:[#allocation2 + $0x100] sm:$0xff]
    %v1613 = vld [vmem:[#allocation2 + $0x110] sm:$0xff]
    %v1614 = vld [vmem:[#allocation2 + $0x120] sm:$0xff]
    %v1615 = vld [vmem:[#allocation2 + $0x140] sm:$0xff]
    %v1616 = vld [vmem:[#allocation2 + $0x150] sm:$0xff]
    %v1617 = vld [vmem:[#allocation2 + $0x160] sm:$0xff]
    %v1618 = vld [vmem:[#allocation2 + $0x180] sm:$0xff]
    %v1619 = vld [vmem:[#allocation2 + $0x190] sm:$0xff]
    %v1620 = vld [vmem:[#allocation2 + $0x1a0] sm:$0xff]
    %v1621 = vld [vmem:[#allocation2 + $0x1c0] sm:$0xff]
    %v1622 = vld [vmem:[#allocation2 + $0x1d0] sm:$0xff]
    %v1623 = vld [vmem:[#allocation2 + $0x1e0] sm:$0xff]
    %v1624 = vld [vmem:[#allocation2] sm:$0xfe]
    %v1625 = vld [vmem:[#allocation2 + $0x30] sm:$0x1]
    %v1626 = vld [vmem:[#allocation2 + $0x40] sm:$0xfe]
    %v1627 = vld [vmem:[#allocation2 + $0x70] sm:$0x1]
    %v1628 = vld [vmem:[#allocation2 + $0x80] sm:$0xfe]
    %v1629 = vld [vmem:[#allocation2 + $0xb0] sm:$0x1]
    %v1630 = vld [vmem:[#allocation2 + $0xc0] sm:$0xfe]
    %v1631 = vld [vmem:[#allocation2 + $0xf0] sm:$0x1]
    %v1632 = vld [vmem:[#allocation2 + $0x100] sm:$0xfe]
    %v1633 = vld [vmem:[#allocation2 + $0x130] sm:$0x1]
    %v1634 = vld [vmem:[#allocation2 + $0x140] sm:$0xfe]
    %v1635 = vld [vmem:[#allocation2 + $0x170] sm:$0x1]
    %v1636 = vld [vmem:[#allocation2 + $0x180] sm:$0xfe]
    %v1637 = vld [vmem:[#allocation2 + $0x1b0] sm:$0x1]
    %v1638 = vld [vmem:[#allocation2 + $0x1c0] sm:$0xfe]
    %v1639 = vld [vmem:[#allocation2 + $0x1f0] sm:$0x1]
    %vm1672 = vcmask 1046528
    %v1673 = vrot.slane %v1624, 1
    %v1674 = vrot.slane %v1601, 1
    %v1675 = vsel %vm1672, %v1673, %v1674
    %v1676 = vrot.slane %v1602, 1
    %v1677 = vsel %vm1672, %v1674, %v1676
    %v1678 = vrot.slane %v1625, 1
    %v1679 = vsel %vm1672, %v1676, %v1678
    %v1680 = vrot.slane %v1626, 1
    %v1681 = vrot.slane %v1604, 1
    %v1682 = vsel %vm1672, %v1680, %v1681
    %v1683 = vrot.slane %v1605, 1
    %v1684 = vsel %vm1672, %v1681, %v1683
    %v1685 = vrot.slane %v1627, 1
    %v1686 = vsel %vm1672, %v1683, %v1685
    %v1687 = vrot.slane %v1628, 1
    %v1688 = vrot.slane %v1607, 1
    %v1689 = vsel %vm1672, %v1687, %v1688
    %v1690 = vrot.slane %v1608, 1
    %v1691 = vsel %vm1672, %v1688, %v1690
    %v1692 = vrot.slane %v1629, 1
    %v1693 = vsel %vm1672, %v1690, %v1692
    %v1694 = vrot.slane %v1630, 1
    %v1695 = vrot.slane %v1610, 1
    %v1696 = vsel %vm1672, %v1694, %v1695
    %v1697 = vrot.slane %v1611, 1
    %v1698 = vsel %vm1672, %v1695, %v1697
    %v1699 = vrot.slane %v1631, 1
    %v1700 = vsel %vm1672, %v1697, %v1699
    %v1701 = vrot.slane %v1632, 1
    %v1702 = vrot.slane %v1613, 1
    %v1703 = vsel %vm1672, %v1701, %v1702
    %v1704 = vrot.slane %v1614, 1
    %v1705 = vsel %vm1672, %v1702, %v1704
    %v1706 = vrot.slane %v1633, 1
    %v1707 = vsel %vm1672, %v1704, %v1706
    %v1708 = vrot.slane %v1634, 1
    %v1709 = vrot.slane %v1616, 1
    %v1710 = vsel %vm1672, %v1708, %v1709
    %v1711 = vrot.slane %v1617, 1
    %v1712 = vsel %vm1672, %v1709, %v1711
    %v1713 = vrot.slane %v1635, 1
    %v1714 = vsel %vm1672, %v1711, %v1713
    %v1715 = vrot.slane %v1636, 1
    %v1716 = vrot.slane %v1619, 1
    %v1717 = vsel %vm1672, %v1715, %v1716
    %v1718 = vrot.slane %v1620, 1
    %v1719 = vsel %vm1672, %v1716, %v1718
    %v1720 = vrot.slane %v1637, 1
    %v1721 = vsel %vm1672, %v1718, %v1720
    %v1722 = vrot.slane %v1638, 1
    %v1723 = vrot.slane %v1622, 1
    %v1724 = vsel %vm1672, %v1722, %v1723
    %v1725 = vrot.slane %v1623, 1
    %v1726 = vsel %vm1672, %v1723, %v1725
    %v1727 = vrot.slane %v1639, 1
    %v1728 = vsel %vm1672, %v1725, %v1727
    %1729 = vrot.lane.b32.xlu0 %v1675, 80
    %v1730 = vpop.permute.xlu0 %1729
    %1731 = vrot.lane.b32.xlu0 %v1677, 80
    %v1732 = vpop.permute.xlu0 %1731
    %1733 = vrot.lane.b32.xlu0 %v1679, 80
    %v1734 = vpop.permute.xlu0 %1733
    %1735 = vrot.lane.b32.xlu0 %v1682, 80
    %v1736 = vpop.permute.xlu0 %1735
    %1737 = vrot.lane.b32.xlu0 %v1684, 80
    %v1738 = vpop.permute.xlu0 %1737
    %1739 = vrot.lane.b32.xlu0 %v1686, 80
    %v1740 = vpop.permute.xlu0 %1739
    %1741 = vrot.lane.b32.xlu0 %v1689, 80
    %v1742 = vpop.permute.xlu0 %1741
    %1743 = vrot.lane.b32.xlu0 %v1691, 80
    %v1744 = vpop.permute.xlu0 %1743
    %1745 = vrot.lane.b32.xlu0 %v1693, 80
    %v1746 = vpop.permute.xlu0 %1745
    %1747 = vrot.lane.b32.xlu0 %v1696, 80
    %v1748 = vpop.permute.xlu0 %1747
    %1749 = vrot.lane.b32.xlu0 %v1698, 80
    %v1750 = vpop.permute.xlu0 %1749
    %1751 = vrot.lane.b32.xlu0 %v1700, 80
    %v1752 = vpop.permute.xlu0 %1751
    %1753 = vrot.lane.b32.xlu0 %v1703, 80
    %v1754 = vpop.permute.xlu0 %1753
    %1755 = vrot.lane.b32.xlu0 %v1705, 80
    %v1756 = vpop.permute.xlu0 %1755
    %1757 = vrot.lane.b32.xlu0 %v1707, 80
    %v1758 = vpop.permute.xlu0 %1757
    %1759 = vrot.lane.b32.xlu0 %v1710, 80
    %v1760 = vpop.permute.xlu0 %1759
    %1761 = vrot.lane.b32.xlu0 %v1712, 80
    %v1762 = vpop.permute.xlu0 %1761
    %1763 = vrot.lane.b32.xlu0 %v1714, 80
    %v1764 = vpop.permute.xlu0 %1763
    %1765 = vrot.lane.b32.xlu0 %v1717, 80
    %v1766 = vpop.permute.xlu0 %1765
    %1767 = vrot.lane.b32.xlu0 %v1719, 80
    %v1768 = vpop.permute.xlu0 %1767
    %1769 = vrot.lane.b32.xlu0 %v1721, 80
    %v1770 = vpop.permute.xlu0 %1769
    %1771 = vrot.lane.b32.xlu0 %v1724, 80
    %v1772 = vpop.permute.xlu0 %1771
    %1773 = vrot.lane.b32.xlu0 %v1726, 80
    %v1774 = vpop.permute.xlu0 %1773
    %1775 = vrot.lane.b32.xlu0 %v1728, 80
    %v1776 = vpop.permute.xlu0 %1775
    %v1801 = vadd.f32 %v1600, %v1730
    %v1802 = vadd.f32 %v1601, %v1732
    %v1803 = vadd.f32 %v1602, %v1734
    %v1804 = vadd.f32 %v1603, %v1736
    %v1805 = vadd.f32 %v1604, %v1738
    %v1806 = vadd.f32 %v1605, %v1740
    %v1807 = vadd.f32 %v1606, %v1742
    %v1808 = vadd.f32 %v1607, %v1744
    %v1809 = vadd.f32 %v1608, %v1746
    %v1810 = vadd.f32 %v1609, %v1748
    %v1811 = vadd.f32 %v1610, %v1750
    %v1812 = vadd.f32 %v1611, %v1752
    %v1813 = vadd.f32 %v1612, %v1754
    %v1814 = vadd.f32 %v1613, %v1756
    %v1815 = vadd.f32 %v1614, %v1758
    %v1816 = vadd.f32 %v1615, %v1760
    %v1817 = vadd.f32 %v1616, %v1762
    %v1818 = vadd.f32 %v1617, %v1764
    %v1819 = vadd.f32 %v1618, %v1766
    %v1820 = vadd.f32 %v1619, %v1768
    %v1821 = vadd.f32 %v1620, %v1770
    %v1822 = vadd.f32 %v1621, %v1772
    %v1823 = vadd.f32 %v1622, %v1774
    %v1824 = vadd.f32 %v1623, %v1776
    %v1825 = vld [vmem:[#allocation2] sm:$0xfc]
    %v1826 = vld [vmem:[#allocation2 + $0x8] sm:$0xfc]
    %v1827 = vld [vmem:[#allocation2 + $0x10] sm:$0xff]
    %v1828 = vld [vmem:[#allocation2 + $0x18] sm:$0xff]
    %v1829 = vld [vmem:[#allocation2 + $0x20] sm:$0xff]
    %v1830 = vld [vmem:[#allocation2 + $0x28] sm:$0xff]
    %v1831 = vld [vmem:[#allocation2 + $0x30] sm:$0x3]
    %v1832 = vld [vmem:[#allocation2 + $0x38] sm:$0x3]
    %v1833 = vld [vmem:[#allocation2 + $0x40] sm:$0xfc]
    %v1834 = vld [vmem:[#allocation2 + $0x48] sm:$0xfc]
    %v1835 = vld [vmem:[#allocation2 + $0x50] sm:$0xff]
    %v1836 = vld [vmem:[#allocation2 + $0x58] sm:$0xff]
    %v1837 = vld [vmem:[#allocation2 + $0x60] sm:$0xff]
    %v1838 = vld [vmem:[#allocation2 + $0x68] sm:$0xff]
    %v1839 = vld [vmem:[#allocation2 + $0x70] sm:$0x3]
    %v1840 = vld [vmem:[#allocation2 + $0x78] sm:$0x3]
    %v1841 = vld [vmem:[#allocation2 + $0x80] sm:$0xfc]
    %v1842 = vld [vmem:[#allocation2 + $0x88] sm:$0xfc]
    %v1843 = vld [vmem:[#allocation2 + $0x90] sm:$0xff]
    %v1844 = vld [vmem:[#allocation2 + $0x98] sm:$0xff]
    %v1845 = vld [vmem:[#allocation2 + $0xa0] sm:$0xff]
    %v1846 = vld [vmem:[#allocation2 + $0xa8] sm:$0xff]
    %v1847 = vld [vmem:[#allocation2 + $0xb0] sm:$0x3]
    %v1848 = vld [vmem:[#allocation2 + $0xb8] sm:$0x3]
    %v1849 = vld [vmem:[#allocation2 + $0xc0] sm:$0xfc]
    %v1850 = vld [vmem:[#allocation2 + $0xc8] sm:$0xfc]
    %v1851 = vld [vmem:[#allocation2 + $0xd0] sm:$0xff]
    %v1852 = vld [vmem:[#allocation2 + $0xd8] sm:$0xff]
    %v1853 = vld [vmem:[#allocation2 + $0xe0] sm:$0xff]
    %v1854 = vld [vmem:[#allocation2 + $0xe8] sm:$0xff]
    %v1855 = vld [vmem:[#allocation2 + $0xf0] sm:$0x3]
    %v1856 = vld [vmem:[#allocation2 + $0xf8] sm:$0x3]
    %v1857 = vld [vmem:[#allocation2 + $0x100] sm:$0xfc]
    %v1858 = vld [vmem:[#allocation2 + $0x108] sm:$0xfc]
    %v1859 = vld [vmem:[#allocation2 + $0x110] sm:$0xff]
    %v1860 = vld [vmem:[#allocation2 + $0x118] sm:$0xff]
    %v1861 = vld [vmem:[#allocation2 + $0x120] sm:$0xff]
    %v1862 = vld [vmem:[#allocation2 + $0x128] sm:$0xff]
    %v1863 = vld [vmem:[#allocation2 + $0x130] sm:$0x3]
    %v1864 = vld [vmem:[#allocation2 + $0x138] sm:$0x3]
    %v1865 = vld [vmem:[#allocation2 + $0x140] sm:$0xfc]
    %v1866 = vld [vmem:[#allocation2 + $0x148] sm:$0xfc]
    %v1867 = vld [vmem:[#allocation2 + $0x150] sm:$0xff]
    %v1868 = vld [vmem:[#allocation2 + $0x158] sm:$0xff]
    %v1869 = vld [vmem:[#allocation2 + $0x160] sm:$0xff]
    %v1870 = vld [vmem:[#allocation2 + $0x168] sm:$0xff]
    %v1871 = vld [vmem:[#allocation2 + $0x170] sm:$0x3]
    %v1872 = vld [vmem:[#allocation2 + $0x178] sm:$0x3]
    %v1873 = vld [vmem:[#allocation2 + $0x180] sm:$0xfc]
    %v1874 = vld [vmem:[#allocation2 + $0x188] sm:$0xfc]
    %v1875 = vld [vmem:[#allocation2 + $0x190] sm:$0xff]
    %v1876 = vld [vmem:[#allocation2 + $0x198] sm:$0xff]
    %v1877 = vld [vmem:[#allocation2 + $0x1a0] sm:$0xff]
    %v1878 = vld [vmem:[#allocation2 + $0x1a8] sm:$0xff]
    %v1879 = vld [vmem:[#allocation2 + $0x1b0] sm:$0x3]
    %v1880 = vld [vmem:[#allocation2 + $0x1b8] sm:$0x3]
    %v1881 = vld [vmem:[#allocation2 + $0x1c0] sm:$0xfc]
    %v1882 = vld [vmem:[#allocation2 + $0x1c8] sm:$0xfc]
    %v1883 = vld [vmem:[#allocation2 + $0x1d0] sm:$0xff]
    %v1884 = vld [vmem:[#allocation2 + $0x1d8] sm:$0xff]
    %v1885 = vld [vmem:[#allocation2 + $0x1e0] sm:$0xff]
    %v1886 = vld [vmem:[#allocation2 + $0x1e8] sm:$0xff]
    %v1887 = vld [vmem:[#allocation2 + $0x1f0] sm:$0x3]
    %v1888 = vld [vmem:[#allocation2 + $0x1f8] sm:$0x3]
    %vm1953 = vcmask 1045504
    %v1954 = vrot.slane %v1825, 2
    %v1955 = vrot.slane %v1827, 2
    %v1956 = vsel %vm1953, %v1954, %v1955
    %v1957 = vrot.slane %v1826, 2
    %v1958 = vrot.slane %v1828, 2
    %v1959 = vsel %vm1953, %v1957, %v1958
    %v1960 = vrot.slane %v1829, 2
    %v1961 = vsel %vm1953, %v1955, %v1960
    %v1962 = vrot.slane %v1830, 2
    %v1963 = vsel %vm1953, %v1958, %v1962
    %v1964 = vrot.slane %v1831, 2
    %v1965 = vsel %vm1953, %v1960, %v1964
    %v1966 = vrot.slane %v1832, 2
    %v1967 = vsel %vm1953, %v1962, %v1966
    %v1968 = vrot.slane %v1833, 2
    %v1969 = vrot.slane %v1835, 2
    %v1970 = vsel %vm1953, %v1968, %v1969
    %v1971 = vrot.slane %v1834, 2
    %v1972 = vrot.slane %v1836, 2
    %v1973 = vsel %vm1953, %v1971, %v1972
    %v1974 = vrot.slane %v1837, 2
    %v1975 = vsel %vm1953, %v1969, %v1974
    %v1976 = vrot.slane %v1838, 2
    %v1977 = vsel %vm1953, %v1972, %v1976
    %v1978 = vrot.slane %v1839, 2
    %v1979 = vsel %vm1953, %v1974, %v1978
    %v1980 = vrot.slane %v1840, 2
    %v1981 = vsel %vm1953, %v1976, %v1980
    %v1982 = vrot.slane %v1841, 2
    %v1983 = vrot.slane %v1843, 2
    %v1984 = vsel %vm1953, %v1982, %v1983
    %v1985 = vrot.slane %v1842, 2
    %v1986 = vrot.slane %v1844, 2
    %v1987 = vsel %vm1953, %v1985, %v1986
    %v1988 = vrot.slane %v1845, 2
    %v1989 = vsel %vm1953, %v1983, %v1988
    %v1990 = vrot.slane %v1846, 2
    %v1991 = vsel %vm1953, %v1986, %v1990
    %v1992 = vrot.slane %v1847, 2
    %v1993 = vsel %vm1953, %v1988, %v1992
    %v1994 = vrot.slane %v1848, 2
    %v1995 = vsel %vm1953, %v1990, %v1994
    %v1996 = vrot.slane %v1849, 2
    %v1997 = vrot.slane %v1851, 2
    %v1998 = vsel %vm1953, %v1996, %v1997
    %v1999 = vrot.slane %v1850, 2
    %v2000 = vrot.slane %v1852, 2
    %v2001 = vsel %vm1953, %v1999, %v2000
    %v2002 = vrot.slane %v1853, 2
    %v2003 = vsel %vm1953, %v1997, %v2002
    %v2004 = vrot.slane %v1854, 2
    %v2005 = vsel %vm1953, %v2000, %v2004
    %v2006 = vrot.slane %v1855, 2
    %v2007 = vsel %vm1953, %v2002, %v2006
    %v2008 = vrot.slane %v1856, 2
    %v2009 = vsel %vm1953, %v2004, %v2008
    %v2010 = vrot.slane %v1857, 2
    %v2011 = vrot.slane %v1859, 2
    %v2012 = vsel %vm1953, %v2010, %v2011
    %v2013 = vrot.slane %v1858, 2
    %v2014 = vrot.slane %v1860, 2
    %v2015 = vsel %vm1953, %v2013, %v2014
    %v2016 = vrot.slane %v1861, 2
    %v2017 = vsel %vm1953, %v2011, %v2016
    %v2018 = vrot.slane %v1862, 2
    %v2019 = vsel %vm1953, %v2014, %v2018
    %v2020 = vrot.slane %v1863, 2
    %v2021 = vsel %vm1953, %v2016, %v2020
    %v2022 = vrot.slane %v1864, 2
    %v2023 = vsel %vm1953, %v2018, %v2022
    %v2024 = vrot.slane %v1865, 2
    %v2025 = vrot.slane %v1867, 2
    %v2026 = vsel %vm1953, %v2024, %v2025
    %v2027 = vrot.slane %v1866, 2
    %v2028 = vrot.slane %v1868, 2
    %v2029 = vsel %vm1953, %v2027, %v2028
    %v2030 = vrot.slane %v1869, 2
    %v2031 = vsel %vm1953, %v2025, %v2030
    %v2032 = vrot.slane %v1870, 2
    %v2033 = vsel %vm1953, %v2028, %v2032
    %v2034 = vrot.slane %v1871, 2
    %v2035 = vsel %vm1953, %v2030, %v2034
    %v2036 = vrot.slane %v1872, 2
    %v2037 = vsel %vm1953, %v2032, %v2036
    %v2038 = vrot.slane %v1873, 2
    %v2039 = vrot.slane %v1875, 2
    %v2040 = vsel %vm1953, %v2038, %v2039
    %v2041 = vrot.slane %v1874, 2
    %v2042 = vrot.slane %v1876, 2
    %v2043 = vsel %vm1953, %v2041, %v2042
    %v2044 = vrot.slane %v1877, 2
    %v2045 = vsel %vm1953, %v2039, %v2044
    %v2046 = vrot.slane %v1878, 2
    %v2047 = vsel %vm1953, %v2042, %v2046
    %v2048 = vrot.slane %v1879, 2
    %v2049 = vsel %vm1953, %v2044, %v2048
    %v2050 = vrot.slane %v1880, 2
    %v2051 = vsel %vm1953, %v2046, %v2050
    %v2052 = vrot.slane %v1881, 2
    %v2053 = vrot.slane %v1883, 2
    %v2054 = vsel %vm1953, %v2052, %v2053
    %v2055 = vrot.slane %v1882, 2
    %v2056 = vrot.slane %v1884, 2
    %v2057 = vsel %vm1953, %v2055, %v2056
    %v2058 = vrot.slane %v1885, 2
    %v2059 = vsel %vm1953, %v2053, %v2058
    %v2060 = vrot.slane %v1886, 2
    %v2061 = vsel %vm1953, %v2056, %v2060
    %v2062 = vrot.slane %v1887, 2
    %v2063 = vsel %vm1953, %v2058, %v2062
    %v2064 = vrot.slane %v1888, 2
    %v2065 = vsel %vm1953, %v2060, %v2064
    %2066 = vrot.lane.b32.xlu0 %v1956, 32
    %v2067 = vpop.permute.xlu0 %2066
    %2068 = vrot.lane.b32.xlu0 %v1959, 32
    %v2069 = vpop.permute.xlu0 %2068
    %2070 = vrot.lane.b32.xlu0 %v1961, 32
    %v2071 = vpop.permute.xlu0 %2070
    %2072 = vrot.lane.b32.xlu0 %v1963, 32
    %v2073 = vpop.permute.xlu0 %2072
    %2074 = vrot.lane.b32.xlu0 %v1965, 32
    %v2075 = vpop.permute.xlu0 %2074
    %2076 = vrot.lane.b32.xlu0 %v1967, 32
    %v2077 = vpop.permute.xlu0 %2076
    %2078 = vrot.lane.b32.xlu0 %v1970, 32
    %v2079 = vpop.permute.xlu0 %2078
    %2080 = vrot.lane.b32.xlu0 %v1973, 32
    %v2081 = vpop.permute.xlu0 %2080
    %2082 = vrot.lane.b32.xlu0 %v1975, 32
    %v2083 = vpop.permute.xlu0 %2082
    %2084 = vrot.lane.b32.xlu0 %v1977, 32
    %v2085 = vpop.permute.xlu0 %2084
    %2086 = vrot.lane.b32.xlu0 %v1979, 32
    %v2087 = vpop.permute.xlu0 %2086
    %2088 = vrot.lane.b32.xlu0 %v1981, 32
    %v2089 = vpop.permute.xlu0 %2088
    %2090 = vrot.lane.b32.xlu0 %v1984, 32
    %v2091 = vpop.permute.xlu0 %2090
    %2092 = vrot.lane.b32.xlu0 %v1987, 32
    %v2093 = vpop.permute.xlu0 %2092
    %2094 = vrot.lane.b32.xlu0 %v1989, 32
    %v2095 = vpop.permute.xlu0 %2094
    %2096 = vrot.lane.b32.xlu0 %v1991, 32
    %v2097 = vpop.permute.xlu0 %2096
    %2098 = vrot.lane.b32.xlu0 %v1993, 32
    %v2099 = vpop.permute.xlu0 %2098
    %2100 = vrot.lane.b32.xlu0 %v1995, 32
    %v2101 = vpop.permute.xlu0 %2100
    %2102 = vrot.lane.b32.xlu0 %v1998, 32
    %v2103 = vpop.permute.xlu0 %2102
    %2104 = vrot.lane.b32.xlu0 %v2001, 32
    %v2105 = vpop.permute.xlu0 %2104
    %2106 = vrot.lane.b32.xlu0 %v2003, 32
    %v2107 = vpop.permute.xlu0 %2106
    %2108 = vrot.lane.b32.xlu0 %v2005, 32
    %v2109 = vpop.permute.xlu0 %2108
    %2110 = vrot.lane.b32.xlu0 %v2007, 32
    %v2111 = vpop.permute.xlu0 %2110
    %2112 = vrot.lane.b32.xlu0 %v2009, 32
    %v2113 = vpop.permute.xlu0 %2112
    %2114 = vrot.lane.b32.xlu0 %v2012, 32
    %v2115 = vpop.permute.xlu0 %2114
    %2116 = vrot.lane.b32.xlu0 %v2015, 32
    %v2117 = vpop.permute.xlu0 %2116
    %2118 = vrot.lane.b32.xlu0 %v2017, 32
    %v2119 = vpop.permute.xlu0 %2118
    %2120 = vrot.lane.b32.xlu0 %v2019, 32
    %v2121 = vpop.permute.xlu0 %2120
    %2122 = vrot.lane.b32.xlu0 %v2021, 32
    %v2123 = vpop.permute.xlu0 %2122
    %2124 = vrot.lane.b32.xlu0 %v2023, 32
    %v2125 = vpop.permute.xlu0 %2124
    %2126 = vrot.lane.b32.xlu0 %v2026, 32
    %v2127 = vpop.permute.xlu0 %2126
    %2128 = vrot.lane.b32.xlu0 %v2029, 32
    %v2129 = vpop.permute.xlu0 %2128
    %2130 = vrot.lane.b32.xlu0 %v2031, 32
    %v2131 = vpop.permute.xlu0 %2130
    %2132 = vrot.lane.b32.xlu0 %v2033, 32
    %v2133 = vpop.permute.xlu0 %2132
    %2134 = vrot.lane.b32.xlu0 %v2035, 32
    %v2135 = vpop.permute.xlu0 %2134
    %2136 = vrot.lane.b32.xlu0 %v2037, 32
    %v2137 = vpop.permute.xlu0 %2136
    %2138 = vrot.lane.b32.xlu0 %v2040, 32
    %v2139 = vpop.permute.xlu0 %2138
    %2140 = vrot.lane.b32.xlu0 %v2043, 32
    %v2141 = vpop.permute.xlu0 %2140
    %2142 = vrot.lane.b32.xlu0 %v2045, 32
    %v2143 = vpop.permute.xlu0 %2142
    %2144 = vrot.lane.b32.xlu0 %v2047, 32
    %v2145 = vpop.permute.xlu0 %2144
    %2146 = vrot.lane.b32.xlu0 %v2049, 32
    %v2147 = vpop.permute.xlu0 %2146
    %2148 = vrot.lane.b32.xlu0 %v2051, 32
    %v2149 = vpop.permute.xlu0 %2148
    %2150 = vrot.lane.b32.xlu0 %v2054, 32
    %v2151 = vpop.permute.xlu0 %2150
    %2152 = vrot.lane.b32.xlu0 %v2057, 32
    %v2153 = vpop.permute.xlu0 %2152
    %2154 = vrot.lane.b32.xlu0 %v2059, 32
    %v2155 = vpop.permute.xlu0 %2154
    %2156 = vrot.lane.b32.xlu0 %v2061, 32
    %v2157 = vpop.permute.xlu0 %2156
    %2158 = vrot.lane.b32.xlu0 %v2063, 32
    %v2159 = vpop.permute.xlu0 %2158
    %2160 = vrot.lane.b32.xlu0 %v2065, 32
    %v2161 = vpop.permute.xlu0 %2160
    %vm2162 = vcmask 261120
    %v2163 = vsel %vm2162, %v2067, %v2069
    %v2164 = vsel %vm2162, %v2071, %v2073
    %v2165 = vsel %vm2162, %v2075, %v2077
    %v2166 = vsel %vm2162, %v2079, %v2081
    %v2167 = vsel %vm2162, %v2083, %v2085
    %v2168 = vsel %vm2162, %v2087, %v2089
    %v2169 = vsel %vm2162, %v2091, %v2093
    %v2170 = vsel %vm2162, %v2095, %v2097
    %v2171 = vsel %vm2162, %v2099, %v2101
    %v2172 = vsel %vm2162, %v2103, %v2105
    %v2173 = vsel %vm2162, %v2107, %v2109
    %v2174 = vsel %vm2162, %v2111, %v2113
    %v2175 = vsel %vm2162, %v2115, %v2117
    %v2176 = vsel %vm2162, %v2119, %v2121
    %v2177 = vsel %vm2162, %v2123, %v2125
    %v2178 = vsel %vm2162, %v2127, %v2129
    %v2179 = vsel %vm2162, %v2131, %v2133
    %v2180 = vsel %vm2162, %v2135, %v2137
    %v2181 = vsel %vm2162, %v2139, %v2141
    %v2182 = vsel %vm2162, %v2143, %v2145
    %v2183 = vsel %vm2162, %v2147, %v2149
    %v2184 = vsel %vm2162, %v2151, %v2153
    %v2185 = vsel %vm2162, %v2155, %v2157
    %v2186 = vsel %vm2162, %v2159, %v2161
    %v2211 = vadd.f32 %v1801, %v2163
    %v2212 = vadd.f32 %v1802, %v2164
    %v2213 = vadd.f32 %v1803, %v2165
    %v2214 = vadd.f32 %v1804, %v2166
    %v2215 = vadd.f32 %v1805, %v2167
    %v2216 = vadd.f32 %v1806, %v2168
    %v2217 = vadd.f32 %v1807, %v2169
    %v2218 = vadd.f32 %v1808, %v2170
    %v2219 = vadd.f32 %v1809, %v2171
    %v2220 = vadd.f32 %v1810, %v2172
    %v2221 = vadd.f32 %v1811, %v2173
    %v2222 = vadd.f32 %v1812, %v2174
    %v2223 = vadd.f32 %v1813, %v2175
    %v2224 = vadd.f32 %v1814, %v2176
    %v2225 = vadd.f32 %v1815, %v2177
    %v2226 = vadd.f32 %v1816, %v2178
    %v2227 = vadd.f32 %v1817, %v2179
    %v2228 = vadd.f32 %v1818, %v2180
    %v2229 = vadd.f32 %v1819, %v2181
    %v2230 = vadd.f32 %v1820, %v2182
    %v2231 = vadd.f32 %v1821, %v2183
    %v2232 = vadd.f32 %v1822, %v2184
    %v2233 = vadd.f32 %v1823, %v2185
    %v2234 = vadd.f32 %v1824, %v2186
    %v2235 = vld [vmem:[#allocation2 + $0x8] sm:$0xf8]
    %v2236 = vld [vmem:[#allocation2 + $0x38] sm:$0x7]
    %v2237 = vld [vmem:[#allocation2 + $0x48] sm:$0xf8]
    %v2238 = vld [vmem:[#allocation2 + $0x78] sm:$0x7]
    %v2239 = vld [vmem:[#allocation2 + $0x88] sm:$0xf8]
    %v2240 = vld [vmem:[#allocation2 + $0xb8] sm:$0x7]
    %v2241 = vld [vmem:[#allocation2 + $0xc8] sm:$0xf8]
    %v2242 = vld [vmem:[#allocation2 + $0xf8] sm:$0x7]
    %v2243 = vld [vmem:[#allocation2 + $0x108] sm:$0xf8]
    %v2244 = vld [vmem:[#allocation2 + $0x138] sm:$0x7]
    %v2245 = vld [vmem:[#allocation2 + $0x148] sm:$0xf8]
    %v2246 = vld [vmem:[#allocation2 + $0x178] sm:$0x7]
    %v2247 = vld [vmem:[#allocation2 + $0x188] sm:$0xf8]
    %v2248 = vld [vmem:[#allocation2 + $0x1b8] sm:$0x7]
    %v2249 = vld [vmem:[#allocation2 + $0x1c8] sm:$0xf8]
    %v2250 = vld [vmem:[#allocation2 + $0x1f8] sm:$0x7]
    %vm2267 = vcmask 1044480
    %v2268 = vrot.slane %v2235, 3
    %v2269 = vrot.slane %v1828, 3
    %v2270 = vsel %vm2267, %v2268, %v2269
    %v2271 = vrot.slane %v1830, 3
    %v2272 = vsel %vm2267, %v2269, %v2271
    %v2273 = vrot.slane %v2236, 3
    %v2274 = vsel %vm2267, %v2271, %v2273
    %v2275 = vrot.slane %v2237, 3
    %v2276 = vrot.slane %v1836, 3
    %v2277 = vsel %vm2267, %v2275, %v2276
    %v2278 = vrot.slane %v1838, 3
    %v2279 = vsel %vm2267, %v2276, %v2278
    %v2280 = vrot.slane %v2238, 3
    %v2281 = vsel %vm2267, %v2278, %v2280
    %v2282 = vrot.slane %v2239, 3
    %v2283 = vrot.slane %v1844, 3
    %v2284 = vsel %vm2267, %v2282, %v2283
    %v2285 = vrot.slane %v1846, 3
    %v2286 = vsel %vm2267, %v2283, %v2285
    %v2287 = vrot.slane %v2240, 3
    %v2288 = vsel %vm2267, %v2285, %v2287
    %v2289 = vrot.slane %v2241, 3
    %v2290 = vrot.slane %v1852, 3
    %v2291 = vsel %vm2267, %v2289, %v2290
    %v2292 = vrot.slane %v1854, 3
    %v2293 = vsel %vm2267, %v2290, %v2292
    %v2294 = vrot.slane %v2242, 3
    %v2295 = vsel %vm2267, %v2292, %v2294
    %v2296 = vrot.slane %v2243, 3
    %v2297 = vrot.slane %v1860, 3
    %v2298 = vsel %vm2267, %v2296, %v2297
    %v2299 = vrot.slane %v1862, 3
    %v2300 = vsel %vm2267, %v2297, %v2299
    %v2301 = vrot.slane %v2244, 3
    %v2302 = vsel %vm2267, %v2299, %v2301
    %v2303 = vrot.slane %v2245, 3
    %v2304 = vrot.slane %v1868, 3
    %v2305 = vsel %vm2267, %v2303, %v2304
    %v2306 = vrot.slane %v1870, 3
    %v2307 = vsel %vm2267, %v2304, %v2306
    %v2308 = vrot.slane %v2246, 3
    %v2309 = vsel %vm2267, %v2306, %v2308
    %v2310 = vrot.slane %v2247, 3
    %v2311 = vrot.slane %v1876, 3
    %v2312 = vsel %vm2267, %v2310, %v2311
    %v2313 = vrot.slane %v1878, 3
    %v2314 = vsel %vm2267, %v2311, %v2313
    %v2315 = vrot.slane %v2248, 3
    %v2316 = vsel %vm2267, %v2313, %v2315
    %v2317 = vrot.slane %v2249, 3
    %v2318 = vrot.slane %v1884, 3
    %v2319 = vsel %vm2267, %v2317, %v2318
    %v2320 = vrot.slane %v1886, 3
    %v2321 = vsel %vm2267, %v2318, %v2320
    %v2322 = vrot.slane %v2250, 3
    %v2323 = vsel %vm2267, %v2320, %v2322
    %2324 = vrot.lane.b32.xlu0 %v2270, 112
    %v2325 = vpop.permute.xlu0 %2324
    %2326 = vrot.lane.b32.xlu0 %v2272, 112
    %v2327 = vpop.permute.xlu0 %2326
    %2328 = vrot.lane.b32.xlu0 %v2274, 112
    %v2329 = vpop.permute.xlu0 %2328
    %2330 = vrot.lane.b32.xlu0 %v2277, 112
    %v2331 = vpop.permute.xlu0 %2330
    %2332 = vrot.lane.b32.xlu0 %v2279, 112
    %v2333 = vpop.permute.xlu0 %2332
    %2334 = vrot.lane.b32.xlu0 %v2281, 112
    %v2335 = vpop.permute.xlu0 %2334
    %2336 = vrot.lane.b32.xlu0 %v2284, 112
    %v2337 = vpop.permute.xlu0 %2336
    %2338 = vrot.lane.b32.xlu0 %v2286, 112
    %v2339 = vpop.permute.xlu0 %2338
    %2340 = vrot.lane.b32.xlu0 %v2288, 112
    %v2341 = vpop.permute.xlu0 %2340
    %2342 = vrot.lane.b32.xlu0 %v2291, 112
    %v2343 = vpop.permute.xlu0 %2342
    %2344 = vrot.lane.b32.xlu0 %v2293, 112
    %v2345 = vpop.permute.xlu0 %2344
    %2346 = vrot.lane.b32.xlu0 %v2295, 112
    %v2347 = vpop.permute.xlu0 %2346
    %2348 = vrot.lane.b32.xlu0 %v2298, 112
    %v2349 = vpop.permute.xlu0 %2348
    %2350 = vrot.lane.b32.xlu0 %v2300, 112
    %v2351 = vpop.permute.xlu0 %2350
    %2352 = vrot.lane.b32.xlu0 %v2302, 112
    %v2353 = vpop.permute.xlu0 %2352
    %2354 = vrot.lane.b32.xlu0 %v2305, 112
    %v2355 = vpop.permute.xlu0 %2354
    %2356 = vrot.lane.b32.xlu0 %v2307, 112
    %v2357 = vpop.permute.xlu0 %2356
    %2358 = vrot.lane.b32.xlu0 %v2309, 112
    %v2359 = vpop.permute.xlu0 %2358
    %2360 = vrot.lane.b32.xlu0 %v2312, 112
    %v2361 = vpop.permute.xlu0 %2360
    %2362 = vrot.lane.b32.xlu0 %v2314, 112
    %v2363 = vpop.permute.xlu0 %2362
    %2364 = vrot.lane.b32.xlu0 %v2316, 112
    %v2365 = vpop.permute.xlu0 %2364
    %2366 = vrot.lane.b32.xlu0 %v2319, 112
    %v2367 = vpop.permute.xlu0 %2366
    %2368 = vrot.lane.b32.xlu0 %v2321, 112
    %v2369 = vpop.permute.xlu0 %2368
    %2370 = vrot.lane.b32.xlu0 %v2323, 112
    %v2371 = vpop.permute.xlu0 %2370
    %v2396 = vadd.f32 %v2211, %v2325
    %v2397 = vadd.f32 %v2212, %v2327
    %v2398 = vadd.f32 %v2213, %v2329
    %v2399 = vadd.f32 %v2214, %v2331
    %v2400 = vadd.f32 %v2215, %v2333
    %v2401 = vadd.f32 %v2216, %v2335
    %v2402 = vadd.f32 %v2217, %v2337
    %v2403 = vadd.f32 %v2218, %v2339
    %v2404 = vadd.f32 %v2219, %v2341
    %v2405 = vadd.f32 %v2220, %v2343
    %v2406 = vadd.f32 %v2221, %v2345
    %v2407 = vadd.f32 %v2222, %v2347
    %v2408 = vadd.f32 %v2223, %v2349
    %v2409 = vadd.f32 %v2224, %v2351
    %v2410 = vadd.f32 %v2225, %v2353
    %v2411 = vadd.f32 %v2226, %v2355
    %v2412 = vadd.f32 %v2227, %v2357
    %v2413 = vadd.f32 %v2228, %v2359
    %v2414 = vadd.f32 %v2229, %v2361
    %v2415 = vadd.f32 %v2230, %v2363
    %v2416 = vadd.f32 %v2231, %v2365
    %v2417 = vadd.f32 %v2232, %v2367
    %v2418 = vadd.f32 %v2233, %v2369
    %v2419 = vadd.f32 %v2234, %v2371
    %v2420 = vld [vmem:[#allocation2 + $0x8] sm:$0xf0]
    %v2421 = vld [vmem:[#allocation2 + $0x38] sm:$0xf]
    %v2422 = vld [vmem:[#allocation2 + $0x48] sm:$0xf0]
    %v2423 = vld [vmem:[#allocation2 + $0x78] sm:$0xf]
    %v2424 = vld [vmem:[#allocation2 + $0x88] sm:$0xf0]
    %v2425 = vld [vmem:[#allocation2 + $0xb8] sm:$0xf]
    %v2426 = vld [vmem:[#allocation2 + $0xc8] sm:$0xf0]
    %v2427 = vld [vmem:[#allocation2 + $0xf8] sm:$0xf]
    %v2428 = vld [vmem:[#allocation2 + $0x108] sm:$0xf0]
    %v2429 = vld [vmem:[#allocation2 + $0x138] sm:$0xf]
    %v2430 = vld [vmem:[#allocation2 + $0x148] sm:$0xf0]
    %v2431 = vld [vmem:[#allocation2 + $0x178] sm:$0xf]
    %v2432 = vld [vmem:[#allocation2 + $0x188] sm:$0xf0]
    %v2433 = vld [vmem:[#allocation2 + $0x1b8] sm:$0xf]
    %v2434 = vld [vmem:[#allocation2 + $0x1c8] sm:$0xf0]
    %v2435 = vld [vmem:[#allocation2 + $0x1f8] sm:$0xf]
    %vm2452 = vcmask 1043456
    %v2453 = vrot.slane %v2420, 4
    %v2454 = vrot.slane %v1828, 4
    %v2455 = vsel %vm2452, %v2453, %v2454
    %v2456 = vrot.slane %v1830, 4
    %v2457 = vsel %vm2452, %v2454, %v2456
    %v2458 = vrot.slane %v2421, 4
    %v2459 = vsel %vm2452, %v2456, %v2458
    %v2460 = vrot.slane %v2422, 4
    %v2461 = vrot.slane %v1836, 4
    %v2462 = vsel %vm2452, %v2460, %v2461
    %v2463 = vrot.slane %v1838, 4
    %v2464 = vsel %vm2452, %v2461, %v2463
    %v2465 = vrot.slane %v2423, 4
    %v2466 = vsel %vm2452, %v2463, %v2465
    %v2467 = vrot.slane %v2424, 4
    %v2468 = vrot.slane %v1844, 4
    %v2469 = vsel %vm2452, %v2467, %v2468
    %v2470 = vrot.slane %v1846, 4
    %v2471 = vsel %vm2452, %v2468, %v2470
    %v2472 = vrot.slane %v2425, 4
    %v2473 = vsel %vm2452, %v2470, %v2472
    %v2474 = vrot.slane %v2426, 4
    %v2475 = vrot.slane %v1852, 4
    %v2476 = vsel %vm2452, %v2474, %v2475
    %v2477 = vrot.slane %v1854, 4
    %v2478 = vsel %vm2452, %v2475, %v2477
    %v2479 = vrot.slane %v2427, 4
    %v2480 = vsel %vm2452, %v2477, %v2479
    %v2481 = vrot.slane %v2428, 4
    %v2482 = vrot.slane %v1860, 4
    %v2483 = vsel %vm2452, %v2481, %v2482
    %v2484 = vrot.slane %v1862, 4
    %v2485 = vsel %vm2452, %v2482, %v2484
    %v2486 = vrot.slane %v2429, 4
    %v2487 = vsel %vm2452, %v2484, %v2486
    %v2488 = vrot.slane %v2430, 4
    %v2489 = vrot.slane %v1868, 4
    %v2490 = vsel %vm2452, %v2488, %v2489
    %v2491 = vrot.slane %v1870, 4
    %v2492 = vsel %vm2452, %v2489, %v2491
    %v2493 = vrot.slane %v2431, 4
    %v2494 = vsel %vm2452, %v2491, %v2493
    %v2495 = vrot.slane %v2432, 4
    %v2496 = vrot.slane %v1876, 4
    %v2497 = vsel %vm2452, %v2495, %v2496
    %v2498 = vrot.slane %v1878, 4
    %v2499 = vsel %vm2452, %v2496, %v2498
    %v2500 = vrot.slane %v2433, 4
    %v2501 = vsel %vm2452, %v2498, %v2500
    %v2502 = vrot.slane %v2434, 4
    %v2503 = vrot.slane %v1884, 4
    %v2504 = vsel %vm2452, %v2502, %v2503
    %v2505 = vrot.slane %v1886, 4
    %v2506 = vsel %vm2452, %v2503, %v2505
    %v2507 = vrot.slane %v2435, 4
    %v2508 = vsel %vm2452, %v2505, %v2507
    %2509 = vrot.lane.b32.xlu0 %v2455, 64
    %v2510 = vpop.permute.xlu0 %2509
    %2511 = vrot.lane.b32.xlu0 %v2457, 64
    %v2512 = vpop.permute.xlu0 %2511
    %2513 = vrot.lane.b32.xlu0 %v2459, 64
    %v2514 = vpop.permute.xlu0 %2513
    %2515 = vrot.lane.b32.xlu0 %v2462, 64
    %v2516 = vpop.permute.xlu0 %2515
    %2517 = vrot.lane.b32.xlu0 %v2464, 64
    %v2518 = vpop.permute.xlu0 %2517
    %2519 = vrot.lane.b32.xlu0 %v2466, 64
    %v2520 = vpop.permute.xlu0 %2519
    %2521 = vrot.lane.b32.xlu0 %v2469, 64
    %v2522 = vpop.permute.xlu0 %2521
    %2523 = vrot.lane.b32.xlu0 %v2471, 64
    %v2524 = vpop.permute.xlu0 %2523
    %2525 = vrot.lane.b32.xlu0 %v2473, 64
    %v2526 = vpop.permute.xlu0 %2525
    %2527 = vrot.lane.b32.xlu0 %v2476, 64
    %v2528 = vpop.permute.xlu0 %2527
    %2529 = vrot.lane.b32.xlu0 %v2478, 64
    %v2530 = vpop.permute.xlu0 %2529
    %2531 = vrot.lane.b32.xlu0 %v2480, 64
    %v2532 = vpop.permute.xlu0 %2531
    %2533 = vrot.lane.b32.xlu0 %v2483, 64
    %v2534 = vpop.permute.xlu0 %2533
    %2535 = vrot.lane.b32.xlu0 %v2485, 64
    %v2536 = vpop.permute.xlu0 %2535
    %2537 = vrot.lane.b32.xlu0 %v2487, 64
    %v2538 = vpop.permute.xlu0 %2537
    %2539 = vrot.lane.b32.xlu0 %v2490, 64
    %v2540 = vpop.permute.xlu0 %2539
    %2541 = vrot.lane.b32.xlu0 %v2492, 64
    %v2542 = vpop.permute.xlu0 %2541
    %2543 = vrot.lane.b32.xlu0 %v2494, 64
    %v2544 = vpop.permute.xlu0 %2543
    %2545 = vrot.lane.b32.xlu0 %v2497, 64
    %v2546 = vpop.permute.xlu0 %2545
    %2547 = vrot.lane.b32.xlu0 %v2499, 64
    %v2548 = vpop.permute.xlu0 %2547
    %2549 = vrot.lane.b32.xlu0 %v2501, 64
    %v2550 = vpop.permute.xlu0 %2549
    %2551 = vrot.lane.b32.xlu0 %v2504, 64
    %v2552 = vpop.permute.xlu0 %2551
    %2553 = vrot.lane.b32.xlu0 %v2506, 64
    %v2554 = vpop.permute.xlu0 %2553
    %2555 = vrot.lane.b32.xlu0 %v2508, 64
    %v2556 = vpop.permute.xlu0 %2555
    %v2581 = vadd.f32 %v2396, %v2510
    %v2582 = vadd.f32 %v2397, %v2512
    %v2583 = vadd.f32 %v2398, %v2514
    %v2584 = vadd.f32 %v2399, %v2516
    %v2585 = vadd.f32 %v2400, %v2518
    %v2586 = vadd.f32 %v2401, %v2520
    %v2587 = vadd.f32 %v2402, %v2522
    %v2588 = vadd.f32 %v2403, %v2524
    %v2589 = vadd.f32 %v2404, %v2526
    %v2590 = vadd.f32 %v2405, %v2528
    %v2591 = vadd.f32 %v2406, %v2530
    %v2592 = vadd.f32 %v2407, %v2532
    %v2593 = vadd.f32 %v2408, %v2534
    %v2594 = vadd.f32 %v2409, %v2536
    %v2595 = vadd.f32 %v2410, %v2538
    %v2596 = vadd.f32 %v2411, %v2540
    %v2597 = vadd.f32 %v2412, %v2542
    %v2598 = vadd.f32 %v2413, %v2544
    %v2599 = vadd.f32 %v2414, %v2546
    %v2600 = vadd.f32 %v2415, %v2548
    %v2601 = vadd.f32 %v2416, %v2550
    %v2602 = vadd.f32 %v2417, %v2552
    %v2603 = vadd.f32 %v2418, %v2554
    %v2604 = vadd.f32 %v2419, %v2556
    %v2605 = vld [vmem:[#allocation8] sm:$0xff]
    %v2606 = vld [vmem:[#allocation8 + $0x8] sm:$0xff]
    %v2607 = vld [vmem:[#allocation8 + $0x10] sm:$0xff]
    %v2608 = vadd.f32 %v2581, %v2605
    %v2609 = vadd.f32 %v2582, %v2606
    %v2610 = vadd.f32 %v2583, %v2607
    %v2611 = vadd.f32 %v2584, %v2605
    %v2612 = vadd.f32 %v2585, %v2606
    %v2613 = vadd.f32 %v2586, %v2607
    %v2614 = vadd.f32 %v2587, %v2605
    %v2615 = vadd.f32 %v2588, %v2606
    %v2616 = vadd.f32 %v2589, %v2607
    %v2617 = vadd.f32 %v2590, %v2605
    %v2618 = vadd.f32 %v2591, %v2606
    %v2619 = vadd.f32 %v2592, %v2607
    %v2620 = vadd.f32 %v2593, %v2605
    %v2621 = vadd.f32 %v2594, %v2606
    %v2622 = vadd.f32 %v2595, %v2607
    %v2623 = vadd.f32 %v2596, %v2605
    %v2624 = vadd.f32 %v2597, %v2606
    %v2625 = vadd.f32 %v2598, %v2607
    %v2626 = vadd.f32 %v2599, %v2605
    %v2627 = vadd.f32 %v2600, %v2606
    %v2628 = vadd.f32 %v2601, %v2607
    %v2629 = vadd.f32 %v2602, %v2605
    %v2630 = vadd.f32 %v2603, %v2606
    %v2631 = vadd.f32 %v2604, %v2607
    %v2632 = vmax.f32 %v2608, 0.0
    %v2633 = vmax.f32 %v2609, 0.0
    %v2634 = vmax.f32 %v2610, 0.0
    %v2635 = vmax.f32 %v2611, 0.0
    %v2636 = vmax.f32 %v2612, 0.0
    %v2637 = vmax.f32 %v2613, 0.0
    %v2638 = vmax.f32 %v2614, 0.0
    %v2639 = vmax.f32 %v2615, 0.0
    %v2640 = vmax.f32 %v2616, 0.0
    %v2641 = vmax.f32 %v2617, 0.0
    %v2642 = vmax.f32 %v2618, 0.0
    %v2643 = vmax.f32 %v2619, 0.0
    %v2644 = vmax.f32 %v2620, 0.0
    %v2645 = vmax.f32 %v2621, 0.0
    %v2646 = vmax.f32 %v2622, 0.0
    %v2647 = vmax.f32 %v2623, 0.0
    %v2648 = vmax.f32 %v2624, 0.0
    %v2649 = vmax.f32 %v2625, 0.0
    %v2650 = vmax.f32 %v2626, 0.0
    %v2651 = vmax.f32 %v2627, 0.0
    %v2652 = vmax.f32 %v2628, 0.0
    %v2653 = vmax.f32 %v2629, 0.0
    %v2654 = vmax.f32 %v2630, 0.0
    %v2655 = vmax.f32 %v2631, 0.0
    %vm2656 = vcmask 392192
    %v2657 = vsel %vm2656, %v2632, -inf
    %v2658 = vsel %vm2656, %v2633, -inf
    %v2659 = vmax.f32 %v2657, %v2658
    %v2660 = vsel %vm2656, %v2634, -inf
    %v2661 = vmax.f32 %v2659, %v2660
    %v2662 = vrot.slane %v2661, 4
    %v2663 = vmax.f32 %v2661, %v2662
    %v2664 = vrot.slane %v2663, 2
    %v2665 = vmax.f32 %v2663, %v2664
    %v2666 = vrot.slane %v2665, 1
    %v2667 = vmax.f32 %v2665, %v2666
    %v2668 = vsel %vm2656, %v2635, -inf
    %v2669 = vsel %vm2656, %v2636, -inf
    %v2670 = vmax.f32 %v2668, %v2669
    %v2671 = vsel %vm2656, %v2637, -inf
    %v2672 = vmax.f32 %v2670, %v2671
    %v2673 = vrot.slane %v2672, 4
    %v2674 = vmax.f32 %v2672, %v2673
    %v2675 = vrot.slane %v2674, 2
    %v2676 = vmax.f32 %v2674, %v2675
    %v2677 = vrot.slane %v2676, 1
    %v2678 = vmax.f32 %v2676, %v2677
    %v2679 = vsel %vm2656, %v2638, -inf
    %v2680 = vsel %vm2656, %v2639, -inf
    %v2681 = vmax.f32 %v2679, %v2680
    %v2682 = vsel %vm2656, %v2640, -inf
    %v2683 = vmax.f32 %v2681, %v2682
    %v2684 = vrot.slane %v2683, 4
    %v2685 = vmax.f32 %v2683, %v2684
    %v2686 = vrot.slane %v2685, 2
    %v2687 = vmax.f32 %v2685, %v2686
    %v2688 = vrot.slane %v2687, 1
    %v2689 = vmax.f32 %v2687, %v2688
    %v2690 = vsel %vm2656, %v2641, -inf
    %v2691 = vsel %vm2656, %v2642, -inf
    %v2692 = vmax.f32 %v2690, %v2691
    %v2693 = vsel %vm2656, %v2643, -inf
    %v2694 = vmax.f32 %v2692, %v2693
    %v2695 = vrot.slane %v2694, 4
    %v2696 = vmax.f32 %v2694, %v2695
    %v2697 = vrot.slane %v2696, 2
    %v2698 = vmax.f32 %v2696, %v2697
    %v2699 = vrot.slane %v2698, 1
    %v2700 = vmax.f32 %v2698, %v2699
    %v2701 = vsel %vm2656, %v2644, -inf
    %v2702 = vsel %vm2656, %v2645, -inf
    %v2703 = vmax.f32 %v2701, %v2702
    %v2704 = vsel %vm2656, %v2646, -inf
    %v2705 = vmax.f32 %v2703, %v2704
    %v2706 = vrot.slane %v2705, 4
    %v2707 = vmax.f32 %v2705, %v2706
    %v2708 = vrot.slane %v2707, 2
    %v2709 = vmax.f32 %v2707, %v2708
    %v2710 = vrot.slane %v2709, 1
    %v2711 = vmax.f32 %v2709, %v2710
    %v2712 = vsel %vm2656, %v2647, -inf
    %v2713 = vsel %vm2656, %v2648, -inf
    %v2714 = vmax.f32 %v2712, %v2713
    %v2715 = vsel %vm2656, %v2649, -inf
    %v2716 = vmax.f32 %v2714, %v2715
    %v2717 = vrot.slane %v2716, 4
    %v2718 = vmax.f32 %v2716, %v2717
    %v2719 = vrot.slane %v2718, 2
    %v2720 = vmax.f32 %v2718, %v2719
    %v2721 = vrot.slane %v2720, 1
    %v2722 = vmax.f32 %v2720, %v2721
    %v2723 = vsel %vm2656, %v2650, -inf
    %v2724 = vsel %vm2656, %v2651, -inf
    %v2725 = vmax.f32 %v2723, %v2724
    %v2726 = vsel %vm2656, %v2652, -inf
    %v2727 = vmax.f32 %v2725, %v2726
    %v2728 = vrot.slane %v2727, 4
    %v2729 = vmax.f32 %v2727, %v2728
    %v2730 = vrot.slane %v2729, 2
    %v2731 = vmax.f32 %v2729, %v2730
    %v2732 = vrot.slane %v2731, 1
    %v2733 = vmax.f32 %v2731, %v2732
    %v2734 = vsel %vm2656, %v2653, -inf
    %v2735 = vsel %vm2656, %v2654, -inf
    %v2736 = vmax.f32 %v2734, %v2735
    %v2737 = vsel %vm2656, %v2655, -inf
    %v2738 = vmax.f32 %v2736, %v2737
    %v2739 = vrot.slane %v2738, 4
    %v2740 = vmax.f32 %v2738, %v2739
    %v2741 = vrot.slane %v2740, 2
    %v2742 = vmax.f32 %v2740, %v2741
    %v2743 = vrot.slane %v2742, 1
    %v2744 = vmax.f32 %v2742, %v2743
    %v2745 = vld [vmem:[#allocation9] sm:$0xff]
    %v2746 = vld [vmem:[#allocation9 + $0x8] sm:$0xff]
    %v2747 = vld [vmem:[#allocation9 + $0x10] sm:$0xff]
    %v2748 = vld [vmem:[#allocation9 + $0x18] sm:$0xff]
    %v2749 = vld [vmem:[#allocation9 + $0x20] sm:$0xff]
    %v2750 = vld [vmem:[#allocation9 + $0x28] sm:$0xff]
    %v2751 = vld [vmem:[%s4] sm:$0x1]
    %v2753 = vperm.slane %v2751, 0
    %vm2763 = vcmask 1041409
    %v2764 = vsel %vm2763, %v2678, %v2667
    %vm2765 = vcmask 1042434
    %v2766 = vsel %vm2765, %v2689, %v2764
    %vm2767 = vcmask 1043459
    %v2768 = vsel %vm2767, %v2700, %v2766
    %vm2769 = vcmask 1044484
    %v2770 = vsel %vm2769, %v2711, %v2768
    %vm2771 = vcmask 1045509
    %v2772 = vsel %vm2771, %v2722, %v2770
    %vm2773 = vcmask 1046534
    %v2774 = vsel %vm2773, %v2733, %v2772
    %vm2775 = vcmask 1047559
    %v2776 = vsel %vm2775, %v2744, %v2774
    %v2777 = vsel %vm2656, %v2776, 0
    %2779 = vmatpush.msra.mxu0 0.0
    %2780 = vmatpush.msra.mxu0 0.0
    %2781 = vmatpush.msra.mxu0 0.0
    %2782 = vmatpush.msra.mxu0 0.0
    %2783 = vmatpush.msra.mxu0 0.0
    %2784 = vmatpush.msra.mxu0 0.0
    %2785 = vmatpush.msra.mxu0 0.0
    %2786 = vmatpush.msra.mxu0 0.0
    %2787 = vmatpush.msra.mxu0 0.0
    %2788 = vmatpush.msra.mxu0 0.0
    %2789 = vmatpush.msra.mxu0 %v2750
    %2790 = vmatpush.msra.mxu0 %v2749
    %2791 = vmatpush.msra.mxu0 %v2748
    %2792 = vmatpush.msra.mxu0 %v2747
    %2793 = vmatpush.msra.mxu0 %v2746
    %2794 = vmatpush.msra.mxu0 %v2745
    %2795 = vmatmul.f32.gmra.mxu0 %v2777
    %v2796 = vpop.f32.mrf.mxu0
    %v2797 = vadd.f32 %v2753, %v2796
    %2798 = vdwg.mxu0
    %2799 = vst [vmem:[#allocation11] sm:$0xff] %v2797
    // Predicated region
    $region38: #{tpu_custom_call.1} parent=1 // pred_check
      _
    $region39: #{tpu_custom_call.1} parent=1 // pred_check_branch
      %2801 = sbr.rel (0) target = $region41
    $region40: #{tpu_custom_call.1} parent=1 // pred_region
      %2803 = vsyncadd [#allocation5], 0
      %s2805 = sshll.u32 [#allocation11], 4
      %s2806 = int_to_ptr.vmem [resolvable:$true] %s2805
      %s2807 = sshll.u32 %s5, 4
      %s2808 = int_to_ptr.hbm [resolvable:$true] %s2807
      %2810 = dma.vmem_to_hbm [thread:$0]  %s2806, 128, %s2808, [#allocation5]
    $region41: #{tpu_custom_call.1} parent=1 // pred_fallthru
      _
    // Predicated region
    $region42: #{tpu_custom_call.1} parent=1 // pred_check
      _
    $region43: #{tpu_custom_call.1} parent=1 // pred_check_branch
      %2812 = sbr.rel (0) target = $region45
    $region44: #{tpu_custom_call.1} parent=1 // pred_region
      %2814 = dma.done [#allocation5], 128
    $region45: #{tpu_custom_call.1} parent=1 // pred_fallthru
      _
    %2815 = vsyncpa [#allocation4], 1
    %2816 = vsyncpa [#allocation7], 1
    %2817 = vsyncpa [#allocation10], 1
    %2818 = vsyncpa [#allocation5], 1

</llo_original>
